<compile_context>
chip_gen: v6e
topology: v6e:2x2x1
jax: 0.10.0
libtpu: 0.0.40
codegen_flags: <defaults>
</compile_context>

<pallas_src>
import jax
import jax.numpy as jnp
from jax import lax
from jax.experimental import pallas as pl
from jax.experimental.pallas import tpu as pltpu


def lstm_fc_kernel(ids_ref, h0_ref, c0_ref,
                   xtab_ref, whh_t_ref, b_ref,
                   wfc_t_ref, bfc_ref,
                   out_ref, h_out_ref, c_out_ref,
                   hist_sc):
    SB = ids_ref.shape[0]
    B, H = h0_ref.shape
    V = xtab_ref.shape[0]
    S = SB // B

    # ---- hoisted, non-recurrent part -------------------------------------
    # Fused embedding gather + input projection:
    #   one_hot(ids) @ (embedding @ W_ih^T)  ==  gather(embedding)[ids] @ W_ih^T
    # (one-hot rows are exact, so the gather is bit-exact on the MXU).
    ids = ids_ref[...]                                                # (S*B, 1) int32
    onehot = (lax.broadcasted_iota(jnp.int32, (SB, V), 1) == ids
              ).astype(jnp.float32)                                   # (S*B, V)
    x_proj = (jnp.dot(onehot, xtab_ref[...],
                      preferred_element_type=jnp.float32)
              + b_ref[...])                                           # (S*B, 4H)

    whh_t = whh_t_ref[...]                                            # (H, 4H)
    h = h0_ref[...]                                                   # (B, H)
    c = c0_ref[...]                                                   # (B, H)

    # ---- serial recurrence (fully unrolled; S is small & static) ---------
    # PyTorch gate order [i, f, g, o]; only h_prev @ W_hh^T is on the critical path.
    for t in range(S):
        gates = x_proj[t * B:(t + 1) * B, :] + jnp.dot(
            h, whh_t, preferred_element_type=jnp.float32)             # (B, 4H)
        i_g = jax.nn.sigmoid(gates[:, 0 * H:1 * H])
        f_g = jax.nn.sigmoid(gates[:, 1 * H:2 * H])
        g_g = jnp.tanh(gates[:, 2 * H:3 * H])
        o_g = jax.nn.sigmoid(gates[:, 3 * H:4 * H])
        c = f_g * c + i_g * g_g
        h = o_g * jnp.tanh(c)
        hist_sc[t * B:(t + 1) * B, :] = h

    # ---- batched FC over all timesteps, single slab store -----------------
    # (dropout is identity in eval mode)
    out_ref[...] = (jnp.dot(hist_sc[...], wfc_t_ref[...],
                            preferred_element_type=jnp.float32)
                    + bfc_ref[...]).astype(out_ref.dtype)
    h_out_ref[...] = h.astype(h_out_ref.dtype)
    c_out_ref[...] = c.astype(c_out_ref.dtype)


def lstm_fc_forward(ids, h0, c0, embedding, w_ih, w_hh, b_ih, b_hh, w_fc, b_fc):
    """ids: int32 (S, B); h0, c0: (1, B, H). Returns (logits (S,B,V), (h1, c1))."""
    S, B = ids.shape
    V, E = embedding.shape
    H = h0.shape[-1]

    # Pre-combined / pre-transposed weights (layout plumbing, done once):
    xtab = jnp.dot(embedding, w_ih.T)        # (V, 4H)  fused embed + input-proj table
    whh_t = w_hh.T                           # (H, 4H)
    wfc_t = w_fc.T                           # (H, V)
    b = (b_ih + b_hh).reshape(1, 4 * H)      # combined LSTM bias
    bfc = b_fc.reshape(1, V)
    ids_flat = ids.reshape(S * B, 1).astype(jnp.int32)

    out_shapes = (
        jax.ShapeDtypeStruct((S * B, V), jnp.float32),   # logits slab
        jax.ShapeDtypeStruct((B, H), jnp.float32),       # h1
        jax.ShapeDtypeStruct((B, H), jnp.float32),       # c1
    )

    grid_spec = pltpu.PrefetchScalarGridSpec(
        num_scalar_prefetch=0,
        grid=(1,),                                       # whole problem fits in VMEM
        in_specs=[
            pl.BlockSpec((S * B, 1), lambda i: (0, 0)),      # token ids
            pl.BlockSpec((B, H), lambda i: (0, 0)),          # h0
            pl.BlockSpec((B, H), lambda i: (0, 0)),          # c0
            pl.BlockSpec((V, 4 * H), lambda i: (0, 0)),      # embedding @ W_ih^T
            pl.BlockSpec((H, 4 * H), lambda i: (0, 0)),      # W_hh^T
            pl.BlockSpec((1, 4 * H), lambda i: (0, 0)),      # combined bias
            pl.BlockSpec((H, V), lambda i: (0, 0)),          # W_fc^T
            pl.BlockSpec((1, V), lambda i: (0, 0)),          # b_fc
        ],
        out_specs=[
            pl.BlockSpec((S * B, V), lambda i: (0, 0)),      # logits (one slab)
            pl.BlockSpec((B, H), lambda i: (0, 0)),          # h1
            pl.BlockSpec((B, H), lambda i: (0, 0)),          # c1
        ],
        scratch_shapes=[
            pltpu.VMEM((S * B, H), jnp.float32),             # h history for batched FC
        ],
    )

    logits_flat, h1, c1 = pl.pallas_call(
        lstm_fc_kernel,
        grid_spec=grid_spec,
        out_shape=out_shapes,
        compiler_params=pltpu.CompilerParams(
            dimension_semantics=("arbitrary",)),
    )(ids_flat, h0[0], c0[0], xtab, whh_t, b, wfc_t, bfc)

    logits = logits_flat.reshape(S, B, V)
    return logits, (h1[None], c1[None])


def model_forward(x, hidden, params):
    """x: int32 (S, B, 1); hidden: ((1,B,H),(1,B,H)). Mirrors Model.forward."""
    ids = x[..., 0]                                  # (S, B) — encoder(x).squeeze(2) ids
    h0, c0 = hidden
    logits, (h1, c1) = lstm_fc_forward(
        ids, h0, c0,
        params["embedding"],
        params["w_ih"], params["w_hh"], params["b_ih"], params["b_hh"],
        params["w_fc"], params["b_fc"])
    return logits, (h1, c1)


def reference_forward(x, hidden, params):
    """Pure-JAX reference of the same forward for a correctness check."""
    emb = params["embedding"]
    xe = jnp.take(emb, x[..., 0], axis=0)            # (S, B, E)
    h, c = hidden[0][0], hidden[1][0]                # (B, H)
    H = h.shape[-1]
    outs = []
    for t in range(xe.shape[0]):
        gates = (xe[t] @ params["w_ih"].T + params["b_ih"]
                 + h @ params["w_hh"].T + params["b_hh"])
        i = jax.nn.sigmoid(gates[:, 0*H:1*H])
        f = jax.nn.sigmoid(gates[:, 1*H:2*H])
        g = jnp.tanh(gates[:, 2*H:3*H])
        o = jax.nn.sigmoid(gates[:, 3*H:4*H])
        c = f * c + i * g
        h = o * jnp.tanh(c)
        outs.append(h @ params["w_fc"].T + params["b_fc"])
    logits = jnp.stack(outs, axis=0)
    return logits, (h[None], c[None])


if __name__ == "__main__":
    # Small shapes consistent with the module.
    SEQ, BATCH = 8, 2
    INPUT_SIZE = 32        # vocab
    EMBED_SIZE = 16
    HIDDEN_SIZE = 32
    N_LAYERS = 1

    key = jax.random.PRNGKey(0)
    ks = jax.random.split(key, 8)

    params = {
        "embedding": jax.random.normal(ks[0], (INPUT_SIZE, EMBED_SIZE), jnp.float32) * 0.1,
        "w_ih": jax.random.normal(ks[1], (4 * HIDDEN_SIZE, EMBED_SIZE), jnp.float32) * 0.1,
        "w_hh": jax.random.normal(ks[2], (4 * HIDDEN_SIZE, HIDDEN_SIZE), jnp.float32) * 0.1,
        "b_ih": jax.random.normal(ks[3], (4 * HIDDEN_SIZE,), jnp.float32) * 0.1,
        "b_hh": jax.random.normal(ks[4], (4 * HIDDEN_SIZE,), jnp.float32) * 0.1,
        "w_fc": jax.random.normal(ks[5], (INPUT_SIZE, HIDDEN_SIZE), jnp.float32) * 0.1,
        "b_fc": jax.random.normal(ks[6], (INPUT_SIZE,), jnp.float32) * 0.1,
    }

    x = jax.random.randint(ks[7], (SEQ, BATCH, 1), 0, INPUT_SIZE, dtype=jnp.int32)
    hidden = (jnp.zeros((N_LAYERS, BATCH, HIDDEN_SIZE), jnp.float32),
              jnp.zeros((N_LAYERS, BATCH, HIDDEN_SIZE), jnp.float32))

    logits, (h1, c1) = model_forward(x, hidden, params)
    jax.block_until_ready((logits, h1, c1))

    ref_logits, (ref_h1, ref_c1) = reference_forward(x, hidden, params)
    assert logits.shape == (SEQ, BATCH, INPUT_SIZE)
    assert h1.shape == (N_LAYERS, BATCH, HIDDEN_SIZE)
    assert jnp.allclose(logits, ref_logits, atol=1e-4, rtol=1e-4)
    assert jnp.allclose(h1, ref_h1, atol=1e-4, rtol=1e-4)
    assert jnp.allclose(c1, ref_c1, atol=1e-4, rtol=1e-4)

    print("KERNEL_OK")
</pallas_src>

<mosaic_0001>
module attributes {stable_mosaic.version = 11 : i64} {
  func.func @lstm_fc_kernel(%arg0: i32, %arg1: memref<16x1xi32, #tpu.memory_space<vmem>>, %arg2: memref<2x32xf32, #tpu.memory_space<vmem>>, %arg3: memref<2x32xf32, #tpu.memory_space<vmem>>, %arg4: memref<32x128xf32, #tpu.memory_space<vmem>>, %arg5: memref<32x128xf32, #tpu.memory_space<vmem>>, %arg6: memref<1x128xf32, #tpu.memory_space<vmem>>, %arg7: memref<32x32xf32, #tpu.memory_space<vmem>>, %arg8: memref<1x32xf32, #tpu.memory_space<vmem>>, %arg9: memref<16x32xf32, #tpu.memory_space<vmem>>, %arg10: memref<2x32xf32, #tpu.memory_space<vmem>>, %arg11: memref<2x32xf32, #tpu.memory_space<vmem>>, %arg12: memref<16x32xf32, #tpu.memory_space<vmem>>) attributes {dimension_semantics = [#tpu.dimension_semantics<arbitrary>], iteration_bounds = array<i64: 1>, scalar_prefetch = 0 : i64, scratch_operands = 1 : i64, tpu.core_type = #tpu.core_type<tc>, window_params = [{pipeline_mode = #tpu.pipeline_mode<synchronous>, transform_indices = @transform_0, window_bounds = array<i64: 16, 1>}, {pipeline_mode = #tpu.pipeline_mode<synchronous>, transform_indices = @transform_1, window_bounds = array<i64: 2, 32>}, {pipeline_mode = #tpu.pipeline_mode<synchronous>, transform_indices = @transform_2, window_bounds = array<i64: 2, 32>}, {pipeline_mode = #tpu.pipeline_mode<synchronous>, transform_indices = @transform_3, window_bounds = array<i64: 32, 128>}, {pipeline_mode = #tpu.pipeline_mode<synchronous>, transform_indices = @transform_4, window_bounds = array<i64: 32, 128>}, {pipeline_mode = #tpu.pipeline_mode<synchronous>, transform_indices = @transform_5, window_bounds = array<i64: 1, 128>}, {pipeline_mode = #tpu.pipeline_mode<synchronous>, transform_indices = @transform_6, window_bounds = array<i64: 32, 32>}, {pipeline_mode = #tpu.pipeline_mode<synchronous>, transform_indices = @transform_7, window_bounds = array<i64: 1, 32>}, {pipeline_mode = #tpu.pipeline_mode<synchronous>, transform_indices = @transform_8, window_bounds = array<i64: 16, 32>}, {pipeline_mode = #tpu.pipeline_mode<synchronous>, transform_indices = @transform_9, window_bounds = array<i64: 2, 32>}, {pipeline_mode = #tpu.pipeline_mode<synchronous>, transform_indices = @transform_10, window_bounds = array<i64: 2, 32>}]} {
    %c0 = arith.constant 0 : index
    %c0_0 = arith.constant 0 : index
    %0 = vector.load %arg1[%c0, %c0_0] : memref<16x1xi32, #tpu.memory_space<vmem>>, vector<16x1xi32>
    %1 = tpu.iota {dimensions = array<i32: 1>} : vector<16x32xi32>
    %2 = vector.broadcast %0 : vector<16x1xi32> to vector<16x32xi32>
    %3 = arith.cmpi eq, %1, %2 : vector<16x32xi32>
    %4 = arith.extui %3 : vector<16x32xi1> to vector<16x32xi32>
    %5 = arith.sitofp %4 : vector<16x32xi32> to vector<16x32xf32>
    %c0_1 = arith.constant 0 : index
    %c0_2 = arith.constant 0 : index
    %6 = vector.load %arg4[%c0_1, %c0_2] : memref<32x128xf32, #tpu.memory_space<vmem>>, vector<32x128xf32>
    %cst = arith.constant dense<0.000000e+00> : vector<16x128xf32>
    %7 = tpu.matmul %5, %6, %cst {dimension_numbers = #tpu.dot_dimension_numbers<[1], [0], [0], [1], [0, 0, 1, 1], [], []>} : vector<16x32xf32>, vector<32x128xf32>, vector<16x128xf32> -> vector<16x128xf32>
    %c0_3 = arith.constant 0 : index
    %c0_4 = arith.constant 0 : index
    %8 = vector.load %arg6[%c0_3, %c0_4] : memref<1x128xf32, #tpu.memory_space<vmem>>, vector<1x128xf32>
    %9 = vector.broadcast %8 : vector<1x128xf32> to vector<16x128xf32>
    %10 = arith.addf %7, %9 : vector<16x128xf32>
    %c0_5 = arith.constant 0 : index
    %c0_6 = arith.constant 0 : index
    %11 = vector.load %arg5[%c0_5, %c0_6] : memref<32x128xf32, #tpu.memory_space<vmem>>, vector<32x128xf32>
    %c0_7 = arith.constant 0 : index
    %c0_8 = arith.constant 0 : index
    %12 = vector.load %arg2[%c0_7, %c0_8] : memref<2x32xf32, #tpu.memory_space<vmem>>, vector<2x32xf32>
    %c0_9 = arith.constant 0 : index
    %c0_10 = arith.constant 0 : index
    %13 = vector.load %arg3[%c0_9, %c0_10] : memref<2x32xf32, #tpu.memory_space<vmem>>, vector<2x32xf32>
    %14 = vector.extract_strided_slice %10 {offsets = [0, 0], sizes = [2, 128], strides = [1, 1]} : vector<16x128xf32> to vector<2x128xf32>
    %cst_11 = arith.constant dense<0.000000e+00> : vector<2x128xf32>
    %15 = tpu.matmul %12, %11, %cst_11 {dimension_numbers = #tpu.dot_dimension_numbers<[1], [0], [0], [1], [0, 0, 1, 1], [], []>} : vector<2x32xf32>, vector<32x128xf32>, vector<2x128xf32> -> vector<2x128xf32>
    %16 = arith.addf %14, %15 : vector<2x128xf32>
    %17 = vector.extract_strided_slice %16 {offsets = [0, 0], sizes = [2, 32], strides = [1, 1]} : vector<2x128xf32> to vector<2x32xf32>
    %18 = arith.negf %17 : vector<2x32xf32>
    %19 = math.exp %18 : vector<2x32xf32>
    %cst_12 = arith.constant 1.000000e+00 : f32
    %20 = vector.broadcast %cst_12 : f32 to vector<2x32xf32>
    %21 = arith.addf %20, %19 : vector<2x32xf32>
    %22 = arith.divf %20, %21 : vector<2x32xf32>
    %23 = vector.extract_strided_slice %16 {offsets = [0, 32], sizes = [2, 32], strides = [1, 1]} : vector<2x128xf32> to vector<2x32xf32>
    %24 = arith.negf %23 : vector<2x32xf32>
    %25 = math.exp %24 : vector<2x32xf32>
    %cst_13 = arith.constant 1.000000e+00 : f32
    %26 = vector.broadcast %cst_13 : f32 to vector<2x32xf32>
    %27 = arith.addf %26, %25 : vector<2x32xf32>
    %28 = arith.divf %26, %27 : vector<2x32xf32>
    %29 = vector.extract_strided_slice %16 {offsets = [0, 64], sizes = [2, 32], strides = [1, 1]} : vector<2x128xf32> to vector<2x32xf32>
    %30 = math.tanh %29 : vector<2x32xf32>
    %31 = vector.extract_strided_slice %16 {offsets = [0, 96], sizes = [2, 32], strides = [1, 1]} : vector<2x128xf32> to vector<2x32xf32>
    %32 = arith.negf %31 : vector<2x32xf32>
    %33 = math.exp %32 : vector<2x32xf32>
    %cst_14 = arith.constant 1.000000e+00 : f32
    %34 = vector.broadcast %cst_14 : f32 to vector<2x32xf32>
    %35 = arith.addf %34, %33 : vector<2x32xf32>
    %36 = arith.divf %34, %35 : vector<2x32xf32>
    %37 = arith.mulf %28, %13 : vector<2x32xf32>
    %38 = arith.mulf %22, %30 : vector<2x32xf32>
    %39 = arith.addf %37, %38 : vector<2x32xf32>
    %40 = math.tanh %39 : vector<2x32xf32>
    %41 = arith.mulf %36, %40 : vector<2x32xf32>
    %c0_15 = arith.constant 0 : index
    %c0_16 = arith.constant 0 : index
    %42 = vector.load %arg12[%c0_15, %c0_16] : memref<16x32xf32, #tpu.memory_space<vmem>>, vector<2x32xf32>
    tpu.vector_store %arg12[%c0_15, %c0_16], %41 {strides = array<i32>} : memref<16x32xf32, #tpu.memory_space<vmem>>, vector<2x32xf32>,
    %43 = vector.extract_strided_slice %10 {offsets = [2, 0], sizes = [2, 128], strides = [1, 1]} : vector<16x128xf32> to vector<2x128xf32>
    %cst_17 = arith.constant dense<0.000000e+00> : vector<2x128xf32>
    %44 = tpu.matmul %41, %11, %cst_17 {dimension_numbers = #tpu.dot_dimension_numbers<[1], [0], [0], [1], [0, 0, 1, 1], [], []>} : vector<2x32xf32>, vector<32x128xf32>, vector<2x128xf32> -> vector<2x128xf32>
    %45 = arith.addf %43, %44 : vector<2x128xf32>
    %46 = vector.extract_strided_slice %45 {offsets = [0, 0], sizes = [2, 32], strides = [1, 1]} : vector<2x128xf32> to vector<2x32xf32>
    %47 = arith.negf %46 : vector<2x32xf32>
    %48 = math.exp %47 : vector<2x32xf32>
    %cst_18 = arith.constant 1.000000e+00 : f32
    %49 = vector.broadcast %cst_18 : f32 to vector<2x32xf32>
    %50 = arith.addf %49, %48 : vector<2x32xf32>
    %51 = arith.divf %49, %50 : vector<2x32xf32>
    %52 = vector.extract_strided_slice %45 {offsets = [0, 32], sizes = [2, 32], strides = [1, 1]} : vector<2x128xf32> to vector<2x32xf32>
    %53 = arith.negf %52 : vector<2x32xf32>
    %54 = math.exp %53 : vector<2x32xf32>
    %cst_19 = arith.constant 1.000000e+00 : f32
    %55 = vector.broadcast %cst_19 : f32 to vector<2x32xf32>
    %56 = arith.addf %55, %54 : vector<2x32xf32>
    %57 = arith.divf %55, %56 : vector<2x32xf32>
    %58 = vector.extract_strided_slice %45 {offsets = [0, 64], sizes = [2, 32], strides = [1, 1]} : vector<2x128xf32> to vector<2x32xf32>
    %59 = math.tanh %58 : vector<2x32xf32>
    %60 = vector.extract_strided_slice %45 {offsets = [0, 96], sizes = [2, 32], strides = [1, 1]} : vector<2x128xf32> to vector<2x32xf32>
    %61 = arith.negf %60 : vector<2x32xf32>
    %62 = math.exp %61 : vector<2x32xf32>
    %cst_20 = arith.constant 1.000000e+00 : f32
    %63 = vector.broadcast %cst_20 : f32 to vector<2x32xf32>
    %64 = arith.addf %63, %62 : vector<2x32xf32>
    %65 = arith.divf %63, %64 : vector<2x32xf32>
    %66 = arith.mulf %57, %39 : vector<2x32xf32>
    %67 = arith.mulf %51, %59 : vector<2x32xf32>
    %68 = arith.addf %66, %67 : vector<2x32xf32>
    %69 = math.tanh %68 : vector<2x32xf32>
    %70 = arith.mulf %65, %69 : vector<2x32xf32>
    %c2 = arith.constant 2 : index
    %c0_21 = arith.constant 0 : index
    %71 = vector.load %arg12[%c2, %c0_21] : memref<16x32xf32, #tpu.memory_space<vmem>>, vector<2x32xf32>
    tpu.vector_store %arg12[%c2, %c0_21], %70 {strides = array<i32>} : memref<16x32xf32, #tpu.memory_space<vmem>>, vector<2x32xf32>,
    %72 = vector.extract_strided_slice %10 {offsets = [4, 0], sizes = [2, 128], strides = [1, 1]} : vector<16x128xf32> to vector<2x128xf32>
    %cst_22 = arith.constant dense<0.000000e+00> : vector<2x128xf32>
    %73 = tpu.matmul %70, %11, %cst_22 {dimension_numbers = #tpu.dot_dimension_numbers<[1], [0], [0], [1], [0, 0, 1, 1], [], []>} : vector<2x32xf32>, vector<32x128xf32>, vector<2x128xf32> -> vector<2x128xf32>
    %74 = arith.addf %72, %73 : vector<2x128xf32>
    %75 = vector.extract_strided_slice %74 {offsets = [0, 0], sizes = [2, 32], strides = [1, 1]} : vector<2x128xf32> to vector<2x32xf32>
    %76 = arith.negf %75 : vector<2x32xf32>
    %77 = math.exp %76 : vector<2x32xf32>
    %cst_23 = arith.constant 1.000000e+00 : f32
    %78 = vector.broadcast %cst_23 : f32 to vector<2x32xf32>
    %79 = arith.addf %78, %77 : vector<2x32xf32>
    %80 = arith.divf %78, %79 : vector<2x32xf32>
    %81 = vector.extract_strided_slice %74 {offsets = [0, 32], sizes = [2, 32], strides = [1, 1]} : vector<2x128xf32> to vector<2x32xf32>
    %82 = arith.negf %81 : vector<2x32xf32>
    %83 = math.exp %82 : vector<2x32xf32>
    %cst_24 = arith.constant 1.000000e+00 : f32
    %84 = vector.broadcast %cst_24 : f32 to vector<2x32xf32>
    %85 = arith.addf %84, %83 : vector<2x32xf32>
    %86 = arith.divf %84, %85 : vector<2x32xf32>
    %87 = vector.extract_strided_slice %74 {offsets = [0, 64], sizes = [2, 32], strides = [1, 1]} : vector<2x128xf32> to vector<2x32xf32>
    %88 = math.tanh %87 : vector<2x32xf32>
    %89 = vector.extract_strided_slice %74 {offsets = [0, 96], sizes = [2, 32], strides = [1, 1]} : vector<2x128xf32> to vector<2x32xf32>
    %90 = arith.negf %89 : vector<2x32xf32>
    %91 = math.exp %90 : vector<2x32xf32>
    %cst_25 = arith.constant 1.000000e+00 : f32
    %92 = vector.broadcast %cst_25 : f32 to vector<2x32xf32>
    %93 = arith.addf %92, %91 : vector<2x32xf32>
    %94 = arith.divf %92, %93 : vector<2x32xf32>
    %95 = arith.mulf %86, %68 : vector<2x32xf32>
    %96 = arith.mulf %80, %88 : vector<2x32xf32>
    %97 = arith.addf %95, %96 : vector<2x32xf32>
    %98 = math.tanh %97 : vector<2x32xf32>
    %99 = arith.mulf %94, %98 : vector<2x32xf32>
    %c4 = arith.constant 4 : index
    %c0_26 = arith.constant 0 : index
    %100 = vector.load %arg12[%c4, %c0_26] : memref<16x32xf32, #tpu.memory_space<vmem>>, vector<2x32xf32>
    tpu.vector_store %arg12[%c4, %c0_26], %99 {strides = array<i32>} : memref<16x32xf32, #tpu.memory_space<vmem>>, vector<2x32xf32>,
    %101 = vector.extract_strided_slice %10 {offsets = [6, 0], sizes = [2, 128], strides = [1, 1]} : vector<16x128xf32> to vector<2x128xf32>
    %cst_27 = arith.constant dense<0.000000e+00> : vector<2x128xf32>
    %102 = tpu.matmul %99, %11, %cst_27 {dimension_numbers = #tpu.dot_dimension_numbers<[1], [0], [0], [1], [0, 0, 1, 1], [], []>} : vector<2x32xf32>, vector<32x128xf32>, vector<2x128xf32> -> vector<2x128xf32>
    %103 = arith.addf %101, %102 : vector<2x128xf32>
    %104 = vector.extract_strided_slice %103 {offsets = [0, 0], sizes = [2, 32], strides = [1, 1]} : vector<2x128xf32> to vector<2x32xf32>
    %105 = arith.negf %104 : vector<2x32xf32>
    %106 = math.exp %105 : vector<2x32xf32>
    %cst_28 = arith.constant 1.000000e+00 : f32
    %107 = vector.broadcast %cst_28 : f32 to vector<2x32xf32>
    %108 = arith.addf %107, %106 : vector<2x32xf32>
    %109 = arith.divf %107, %108 : vector<2x32xf32>
    %110 = vector.extract_strided_slice %103 {offsets = [0, 32], sizes = [2, 32], strides = [1, 1]} : vector<2x128xf32> to vector<2x32xf32>
    %111 = arith.negf %110 : vector<2x32xf32>
    %112 = math.exp %111 : vector<2x32xf32>
    %cst_29 = arith.constant 1.000000e+00 : f32
    %113 = vector.broadcast %cst_29 : f32 to vector<2x32xf32>
    %114 = arith.addf %113, %112 : vector<2x32xf32>
    %115 = arith.divf %113, %114 : vector<2x32xf32>
    %116 = vector.extract_strided_slice %103 {offsets = [0, 64], sizes = [2, 32], strides = [1, 1]} : vector<2x128xf32> to vector<2x32xf32>
    %117 = math.tanh %116 : vector<2x32xf32>
    %118 = vector.extract_strided_slice %103 {offsets = [0, 96], sizes = [2, 32], strides = [1, 1]} : vector<2x128xf32> to vector<2x32xf32>
    %119 = arith.negf %118 : vector<2x32xf32>
    %120 = math.exp %119 : vector<2x32xf32>
    %cst_30 = arith.constant 1.000000e+00 : f32
    %121 = vector.broadcast %cst_30 : f32 to vector<2x32xf32>
    %122 = arith.addf %121, %120 : vector<2x32xf32>
    %123 = arith.divf %121, %122 : vector<2x32xf32>
    %124 = arith.mulf %115, %97 : vector<2x32xf32>
    %125 = arith.mulf %109, %117 : vector<2x32xf32>
    %126 = arith.addf %124, %125 : vector<2x32xf32>
    %127 = math.tanh %126 : vector<2x32xf32>
    %128 = arith.mulf %123, %127 : vector<2x32xf32>
    %c6 = arith.constant 6 : index
    %c0_31 = arith.constant 0 : index
    %129 = vector.load %arg12[%c6, %c0_31] : memref<16x32xf32, #tpu.memory_space<vmem>>, vector<2x32xf32>
    tpu.vector_store %arg12[%c6, %c0_31], %128 {strides = array<i32>} : memref<16x32xf32, #tpu.memory_space<vmem>>, vector<2x32xf32>,
    %130 = vector.extract_strided_slice %10 {offsets = [8, 0], sizes = [2, 128], strides = [1, 1]} : vector<16x128xf32> to vector<2x128xf32>
    %cst_32 = arith.constant dense<0.000000e+00> : vector<2x128xf32>
    %131 = tpu.matmul %128, %11, %cst_32 {dimension_numbers = #tpu.dot_dimension_numbers<[1], [0], [0], [1], [0, 0, 1, 1], [], []>} : vector<2x32xf32>, vector<32x128xf32>, vector<2x128xf32> -> vector<2x128xf32>
    %132 = arith.addf %130, %131 : vector<2x128xf32>
    %133 = vector.extract_strided_slice %132 {offsets = [0, 0], sizes = [2, 32], strides = [1, 1]} : vector<2x128xf32> to vector<2x32xf32>
    %134 = arith.negf %133 : vector<2x32xf32>
    %135 = math.exp %134 : vector<2x32xf32>
    %cst_33 = arith.constant 1.000000e+00 : f32
    %136 = vector.broadcast %cst_33 : f32 to vector<2x32xf32>
    %137 = arith.addf %136, %135 : vector<2x32xf32>
    %138 = arith.divf %136, %137 : vector<2x32xf32>
    %139 = vector.extract_strided_slice %132 {offsets = [0, 32], sizes = [2, 32], strides = [1, 1]} : vector<2x128xf32> to vector<2x32xf32>
    %140 = arith.negf %139 : vector<2x32xf32>
    %141 = math.exp %140 : vector<2x32xf32>
    %cst_34 = arith.constant 1.000000e+00 : f32
    %142 = vector.broadcast %cst_34 : f32 to vector<2x32xf32>
    %143 = arith.addf %142, %141 : vector<2x32xf32>
    %144 = arith.divf %142, %143 : vector<2x32xf32>
    %145 = vector.extract_strided_slice %132 {offsets = [0, 64], sizes = [2, 32], strides = [1, 1]} : vector<2x128xf32> to vector<2x32xf32>
    %146 = math.tanh %145 : vector<2x32xf32>
    %147 = vector.extract_strided_slice %132 {offsets = [0, 96], sizes = [2, 32], strides = [1, 1]} : vector<2x128xf32> to vector<2x32xf32>
    %148 = arith.negf %147 : vector<2x32xf32>
    %149 = math.exp %148 : vector<2x32xf32>
    %cst_35 = arith.constant 1.000000e+00 : f32
    %150 = vector.broadcast %cst_35 : f32 to vector<2x32xf32>
    %151 = arith.addf %150, %149 : vector<2x32xf32>
    %152 = arith.divf %150, %151 : vector<2x32xf32>
    %153 = arith.mulf %144, %126 : vector<2x32xf32>
    %154 = arith.mulf %138, %146 : vector<2x32xf32>
    %155 = arith.addf %153, %154 : vector<2x32xf32>
    %156 = math.tanh %155 : vector<2x32xf32>
    %157 = arith.mulf %152, %156 : vector<2x32xf32>
    %c8 = arith.constant 8 : index
    %c0_36 = arith.constant 0 : index
    %158 = vector.load %arg12[%c8, %c0_36] : memref<16x32xf32, #tpu.memory_space<vmem>>, vector<2x32xf32>
    tpu.vector_store %arg12[%c8, %c0_36], %157 {strides = array<i32>} : memref<16x32xf32, #tpu.memory_space<vmem>>, vector<2x32xf32>,
    %159 = vector.extract_strided_slice %10 {offsets = [10, 0], sizes = [2, 128], strides = [1, 1]} : vector<16x128xf32> to vector<2x128xf32>
    %cst_37 = arith.constant dense<0.000000e+00> : vector<2x128xf32>
    %160 = tpu.matmul %157, %11, %cst_37 {dimension_numbers = #tpu.dot_dimension_numbers<[1], [0], [0], [1], [0, 0, 1, 1], [], []>} : vector<2x32xf32>, vector<32x128xf32>, vector<2x128xf32> -> vector<2x128xf32>
    %161 = arith.addf %159, %160 : vector<2x128xf32>
    %162 = vector.extract_strided_slice %161 {offsets = [0, 0], sizes = [2, 32], strides = [1, 1]} : vector<2x128xf32> to vector<2x32xf32>
    %163 = arith.negf %162 : vector<2x32xf32>
    %164 = math.exp %163 : vector<2x32xf32>
    %cst_38 = arith.constant 1.000000e+00 : f32
    %165 = vector.broadcast %cst_38 : f32 to vector<2x32xf32>
    %166 = arith.addf %165, %164 : vector<2x32xf32>
    %167 = arith.divf %165, %166 : vector<2x32xf32>
    %168 = vector.extract_strided_slice %161 {offsets = [0, 32], sizes = [2, 32], strides = [1, 1]} : vector<2x128xf32> to vector<2x32xf32>
    %169 = arith.negf %168 : vector<2x32xf32>
    %170 = math.exp %169 : vector<2x32xf32>
    %cst_39 = arith.constant 1.000000e+00 : f32
    %171 = vector.broadcast %cst_39 : f32 to vector<2x32xf32>
    %172 = arith.addf %171, %170 : vector<2x32xf32>
    %173 = arith.divf %171, %172 : vector<2x32xf32>
    %174 = vector.extract_strided_slice %161 {offsets = [0, 64], sizes = [2, 32], strides = [1, 1]} : vector<2x128xf32> to vector<2x32xf32>
    %175 = math.tanh %174 : vector<2x32xf32>
    %176 = vector.extract_strided_slice %161 {offsets = [0, 96], sizes = [2, 32], strides = [1, 1]} : vector<2x128xf32> to vector<2x32xf32>
    %177 = arith.negf %176 : vector<2x32xf32>
    %178 = math.exp %177 : vector<2x32xf32>
    %cst_40 = arith.constant 1.000000e+00 : f32
    %179 = vector.broadcast %cst_40 : f32 to vector<2x32xf32>
    %180 = arith.addf %179, %178 : vector<2x32xf32>
    %181 = arith.divf %179, %180 : vector<2x32xf32>
    %182 = arith.mulf %173, %155 : vector<2x32xf32>
    %183 = arith.mulf %167, %175 : vector<2x32xf32>
    %184 = arith.addf %182, %183 : vector<2x32xf32>
    %185 = math.tanh %184 : vector<2x32xf32>
    %186 = arith.mulf %181, %185 : vector<2x32xf32>
    %c10 = arith.constant 10 : index
    %c0_41 = arith.constant 0 : index
    %187 = vector.load %arg12[%c10, %c0_41] : memref<16x32xf32, #tpu.memory_space<vmem>>, vector<2x32xf32>
    tpu.vector_store %arg12[%c10, %c0_41], %186 {strides = array<i32>} : memref<16x32xf32, #tpu.memory_space<vmem>>, vector<2x32xf32>,
    %188 = vector.extract_strided_slice %10 {offsets = [12, 0], sizes = [2, 128], strides = [1, 1]} : vector<16x128xf32> to vector<2x128xf32>
    %cst_42 = arith.constant dense<0.000000e+00> : vector<2x128xf32>
    %189 = tpu.matmul %186, %11, %cst_42 {dimension_numbers = #tpu.dot_dimension_numbers<[1], [0], [0], [1], [0, 0, 1, 1], [], []>} : vector<2x32xf32>, vector<32x128xf32>, vector<2x128xf32> -> vector<2x128xf32>
    %190 = arith.addf %188, %189 : vector<2x128xf32>
    %191 = vector.extract_strided_slice %190 {offsets = [0, 0], sizes = [2, 32], strides = [1, 1]} : vector<2x128xf32> to vector<2x32xf32>
    %192 = arith.negf %191 : vector<2x32xf32>
    %193 = math.exp %192 : vector<2x32xf32>
    %cst_43 = arith.constant 1.000000e+00 : f32
    %194 = vector.broadcast %cst_43 : f32 to vector<2x32xf32>
    %195 = arith.addf %194, %193 : vector<2x32xf32>
    %196 = arith.divf %194, %195 : vector<2x32xf32>
    %197 = vector.extract_strided_slice %190 {offsets = [0, 32], sizes = [2, 32], strides = [1, 1]} : vector<2x128xf32> to vector<2x32xf32>
    %198 = arith.negf %197 : vector<2x32xf32>
    %199 = math.exp %198 : vector<2x32xf32>
    %cst_44 = arith.constant 1.000000e+00 : f32
    %200 = vector.broadcast %cst_44 : f32 to vector<2x32xf32>
    %201 = arith.addf %200, %199 : vector<2x32xf32>
    %202 = arith.divf %200, %201 : vector<2x32xf32>
    %203 = vector.extract_strided_slice %190 {offsets = [0, 64], sizes = [2, 32], strides = [1, 1]} : vector<2x128xf32> to vector<2x32xf32>
    %204 = math.tanh %203 : vector<2x32xf32>
    %205 = vector.extract_strided_slice %190 {offsets = [0, 96], sizes = [2, 32], strides = [1, 1]} : vector<2x128xf32> to vector<2x32xf32>
    %206 = arith.negf %205 : vector<2x32xf32>
    %207 = math.exp %206 : vector<2x32xf32>
    %cst_45 = arith.constant 1.000000e+00 : f32
    %208 = vector.broadcast %cst_45 : f32 to vector<2x32xf32>
    %209 = arith.addf %208, %207 : vector<2x32xf32>
    %210 = arith.divf %208, %209 : vector<2x32xf32>
    %211 = arith.mulf %202, %184 : vector<2x32xf32>
    %212 = arith.mulf %196, %204 : vector<2x32xf32>
    %213 = arith.addf %211, %212 : vector<2x32xf32>
    %214 = math.tanh %213 : vector<2x32xf32>
    %215 = arith.mulf %210, %214 : vector<2x32xf32>
    %c12 = arith.constant 12 : index
    %c0_46 = arith.constant 0 : index
    %216 = vector.load %arg12[%c12, %c0_46] : memref<16x32xf32, #tpu.memory_space<vmem>>, vector<2x32xf32>
    tpu.vector_store %arg12[%c12, %c0_46], %215 {strides = array<i32>} : memref<16x32xf32, #tpu.memory_space<vmem>>, vector<2x32xf32>,
    %217 = vector.extract_strided_slice %10 {offsets = [14, 0], sizes = [2, 128], strides = [1, 1]} : vector<16x128xf32> to vector<2x128xf32>
    %cst_47 = arith.constant dense<0.000000e+00> : vector<2x128xf32>
    %218 = tpu.matmul %215, %11, %cst_47 {dimension_numbers = #tpu.dot_dimension_numbers<[1], [0], [0], [1], [0, 0, 1, 1], [], []>} : vector<2x32xf32>, vector<32x128xf32>, vector<2x128xf32> -> vector<2x128xf32>
    %219 = arith.addf %217, %218 : vector<2x128xf32>
    %220 = vector.extract_strided_slice %219 {offsets = [0, 0], sizes = [2, 32], strides = [1, 1]} : vector<2x128xf32> to vector<2x32xf32>
    %221 = arith.negf %220 : vector<2x32xf32>
    %222 = math.exp %221 : vector<2x32xf32>
    %cst_48 = arith.constant 1.000000e+00 : f32
    %223 = vector.broadcast %cst_48 : f32 to vector<2x32xf32>
    %224 = arith.addf %223, %222 : vector<2x32xf32>
    %225 = arith.divf %223, %224 : vector<2x32xf32>
    %226 = vector.extract_strided_slice %219 {offsets = [0, 32], sizes = [2, 32], strides = [1, 1]} : vector<2x128xf32> to vector<2x32xf32>
    %227 = arith.negf %226 : vector<2x32xf32>
    %228 = math.exp %227 : vector<2x32xf32>
    %cst_49 = arith.constant 1.000000e+00 : f32
    %229 = vector.broadcast %cst_49 : f32 to vector<2x32xf32>
    %230 = arith.addf %229, %228 : vector<2x32xf32>
    %231 = arith.divf %229, %230 : vector<2x32xf32>
    %232 = vector.extract_strided_slice %219 {offsets = [0, 64], sizes = [2, 32], strides = [1, 1]} : vector<2x128xf32> to vector<2x32xf32>
    %233 = math.tanh %232 : vector<2x32xf32>
    %234 = vector.extract_strided_slice %219 {offsets = [0, 96], sizes = [2, 32], strides = [1, 1]} : vector<2x128xf32> to vector<2x32xf32>
    %235 = arith.negf %234 : vector<2x32xf32>
    %236 = math.exp %235 : vector<2x32xf32>
    %cst_50 = arith.constant 1.000000e+00 : f32
    %237 = vector.broadcast %cst_50 : f32 to vector<2x32xf32>
    %238 = arith.addf %237, %236 : vector<2x32xf32>
    %239 = arith.divf %237, %238 : vector<2x32xf32>
    %240 = arith.mulf %231, %213 : vector<2x32xf32>
    %241 = arith.mulf %225, %233 : vector<2x32xf32>
    %242 = arith.addf %240, %241 : vector<2x32xf32>
    %243 = math.tanh %242 : vector<2x32xf32>
    %244 = arith.mulf %239, %243 : vector<2x32xf32>
    %c14 = arith.constant 14 : index
    %c0_51 = arith.constant 0 : index
    %245 = vector.load %arg12[%c14, %c0_51] : memref<16x32xf32, #tpu.memory_space<vmem>>, vector<2x32xf32>
    tpu.vector_store %arg12[%c14, %c0_51], %244 {strides = array<i32>} : memref<16x32xf32, #tpu.memory_space<vmem>>, vector<2x32xf32>,
    %c0_52 = arith.constant 0 : index
    %c0_53 = arith.constant 0 : index
    %246 = vector.load %arg12[%c0_52, %c0_53] : memref<16x32xf32, #tpu.memory_space<vmem>>, vector<16x32xf32>
    %c0_54 = arith.constant 0 : index
    %c0_55 = arith.constant 0 : index
    %247 = vector.load %arg7[%c0_54, %c0_55] : memref<32x32xf32, #tpu.memory_space<vmem>>, vector<32x32xf32>
    %cst_56 = arith.constant dense<0.000000e+00> : vector<16x32xf32>
    %248 = tpu.matmul %246, %247, %cst_56 {dimension_numbers = #tpu.dot_dimension_numbers<[1], [0], [0], [1], [0, 0, 1, 1], [], []>} : vector<16x32xf32>, vector<32x32xf32>, vector<16x32xf32> -> vector<16x32xf32>
    %c0_57 = arith.constant 0 : index
    %c0_58 = arith.constant 0 : index
    %249 = vector.load %arg8[%c0_57, %c0_58] : memref<1x32xf32, #tpu.memory_space<vmem>>, vector<1x32xf32>
    %250 = vector.broadcast %249 : vector<1x32xf32> to vector<16x32xf32>
    %251 = arith.addf %248, %250 : vector<16x32xf32>
    %c0_59 = arith.constant 0 : index
    %c0_60 = arith.constant 0 : index
    %252 = vector.load %arg9[%c0_59, %c0_60] : memref<16x32xf32, #tpu.memory_space<vmem>>, vector<16x32xf32>
    tpu.vector_store %arg9[%c0_59, %c0_60], %251 {strides = array<i32>} : memref<16x32xf32, #tpu.memory_space<vmem>>, vector<16x32xf32>,
    %c0_61 = arith.constant 0 : index
    %c0_62 = arith.constant 0 : index
    %253 = vector.load %arg10[%c0_61, %c0_62] : memref<2x32xf32, #tpu.memory_space<vmem>>, vector<2x32xf32>
    tpu.vector_store %arg10[%c0_61, %c0_62], %244 {strides = array<i32>} : memref<2x32xf32, #tpu.memory_space<vmem>>, vector<2x32xf32>,
    %c0_63 = arith.constant 0 : index
    %c0_64 = arith.constant 0 : index
    %254 = vector.load %arg11[%c0_63, %c0_64] : memref<2x32xf32, #tpu.memory_space<vmem>>, vector<2x32xf32>
    tpu.vector_store %arg11[%c0_63, %c0_64], %242 {strides = array<i32>} : memref<2x32xf32, #tpu.memory_space<vmem>>, vector<2x32xf32>,
    return
  }
  func.func @transform_0(%arg0: i32) -> (i32, i32) {
    %c0_i32 = arith.constant 0 : i32
    %c0_i32_0 = arith.constant 0 : i32
    %c0_i32_1 = arith.constant 0 : i32
    return %c0_i32, %c0_i32_0 : i32, i32
  }
  func.func @transform_1(%arg0: i32) -> (i32, i32) {
    %c0_i32 = arith.constant 0 : i32
    %c0_i32_0 = arith.constant 0 : i32
    %c0_i32_1 = arith.constant 0 : i32
    return %c0_i32, %c0_i32_0 : i32, i32
  }
  func.func @transform_2(%arg0: i32) -> (i32, i32) {
    %c0_i32 = arith.constant 0 : i32
    %c0_i32_0 = arith.constant 0 : i32
    %c0_i32_1 = arith.constant 0 : i32
    return %c0_i32, %c0_i32_0 : i32, i32
  }
  func.func @transform_3(%arg0: i32) -> (i32, i32) {
    %c0_i32 = arith.constant 0 : i32
    %c0_i32_0 = arith.constant 0 : i32
    %c0_i32_1 = arith.constant 0 : i32
    return %c0_i32, %c0_i32_0 : i32, i32
  }
  func.func @transform_4(%arg0: i32) -> (i32, i32) {
    %c0_i32 = arith.constant 0 : i32
    %c0_i32_0 = arith.constant 0 : i32
    %c0_i32_1 = arith.constant 0 : i32
    return %c0_i32, %c0_i32_0 : i32, i32
  }
  func.func @transform_5(%arg0: i32) -> (i32, i32) {
    %c0_i32 = arith.constant 0 : i32
    %c0_i32_0 = arith.constant 0 : i32
    %c0_i32_1 = arith.constant 0 : i32
    return %c0_i32, %c0_i32_0 : i32, i32
  }
  func.func @transform_6(%arg0: i32) -> (i32, i32) {
    %c0_i32 = arith.constant 0 : i32
    %c0_i32_0 = arith.constant 0 : i32
    %c0_i32_1 = arith.constant 0 : i32
    return %c0_i32, %c0_i32_0 : i32, i32
  }
  func.func @transform_7(%arg0: i32) -> (i32, i32) {
    %c0_i32 = arith.constant 0 : i32
    %c0_i32_0 = arith.constant 0 : i32
    %c0_i32_1 = arith.constant 0 : i32
    return %c0_i32, %c0_i32_0 : i32, i32
  }
  func.func @transform_8(%arg0: i32) -> (i32, i32) {
    %c0_i32 = arith.constant 0 : i32
    %c0_i32_0 = arith.constant 0 : i32
    %c0_i32_1 = arith.constant 0 : i32
    return %c0_i32, %c0_i32_0 : i32, i32
  }
  func.func @transform_9(%arg0: i32) -> (i32, i32) {
    %c0_i32 = arith.constant 0 : i32
    %c0_i32_0 = arith.constant 0 : i32
    %c0_i32_1 = arith.constant 0 : i32
    return %c0_i32, %c0_i32_0 : i32, i32
  }
  func.func @transform_10(%arg0: i32) -> (i32, i32) {
    %c0_i32 = arith.constant 0 : i32
    %c0_i32_0 = arith.constant 0 : i32
    %c0_i32_1 = arith.constant 0 : i32
    return %c0_i32, %c0_i32_0 : i32, i32
  }
}

</mosaic_0001>

<llo_original>
// kernel: tpu_custom_call.1
$region0: #{tpu_custom_call.1}
  #allocation0 [shape = 'u32[]', space=smem, size = 0x4, offset = 0x4, fixed_abs, tag = 'smem constant byte address 0x4 - core index']
  #allocation1 [shape = 'u32[144,128]{1,0:T(1,128)}', space=vmem, size = 0x12000, scoped, tag = 'internal scratch']
  #allocation2 [shape = 'f32[16,32]{1,0:T(8,128)}', space=vmem, size = 0x2000, scoped, tag = 'scratch operand']
  %s0 = inlined_call_operand.vmem [shape: s32[16,1], index: 0, kind: input, shape index: {}]
  %s1 = inlined_call_operand.vmem [shape: f32[2,32], index: 1, kind: input, shape index: {}]
  %s2 = inlined_call_operand.vmem [shape: f32[2,32], index: 2, kind: input, shape index: {}]
  %s3 = inlined_call_operand.hbm [shape: f32[32,128], index: 3, kind: input, shape index: {}]
  %s4 = inlined_call_operand.hbm [shape: f32[32,128], index: 4, kind: input, shape index: {}]
  %s5 = inlined_call_operand.vmem [shape: f32[1,128], index: 5, kind: input, shape index: {}]
  %s6 = inlined_call_operand.hbm [shape: f32[32,32], index: 6, kind: input, shape index: {}]
  %s7 = inlined_call_operand.vmem [shape: f32[1,32], index: 7, kind: input, shape index: {}]
  %s8 = inlined_call_operand.hbm [shape: f32[16,32], index: 8, kind: output, shape index: {0}]
  %s9 = inlined_call_operand.hbm [shape: f32[2,32], index: 9, kind: output, shape index: {1}]
  %s10 = inlined_call_operand.hbm [shape: f32[2,32], index: 10, kind: output, shape index: {2}]
  %11 = xla_tuple %s8, %s9, %s10
  %s12 = sld [smem:[#allocation0]]
  $region70: #{tpu_custom_call.1} parent=0
    _
  %s14 = ssub.s32 1, %s12
  %s15 = scalar_select 0, %s14, %s12
  $region1: #{tpu_custom_call.1} parent=0
    #allocation3 [shape = 'u8[16384]{0}', space=vmem, size = 0x4000, scoped, tag = 'input window, operand 3, single buffered']
    #allocation4 [shape = 's32[1]{0}', space=sflag, size = 0x4, scoped, tag = 'scoped memory for tpu_custom_call.1']
    #allocation5 [shape = 's32[1]{0}', space=sflag, size = 0x4, scoped, tag = 'scoped memory for tpu_custom_call.1']
    #allocation6 [shape = 'u8[16384]{0}', space=vmem, size = 0x4000, scoped, tag = 'input window, operand 4, single buffered']
    #allocation7 [shape = 's32[1]{0}', space=sflag, size = 0x4, scoped, tag = 'scoped memory for tpu_custom_call.1']
    #allocation8 [shape = 'u8[16384]{0}', space=vmem, size = 0x4000, scoped, tag = 'input window, operand 6, single buffered']
    #allocation9 [shape = 'u8[8192]{0}', space=vmem, size = 0x2000, scoped, tag = 'output window, operand 0, single buffered']
    #allocation10 [shape = 'u8[1024]{0}', space=vmem, size = 0x400, scoped, tag = 'output window, operand 1, single buffered']
    #allocation11 [shape = 's32[1]{0}', space=sflag, size = 0x4, scoped, tag = 'scoped memory for tpu_custom_call.1']
    #allocation12 [shape = 'u8[1024]{0}', space=vmem, size = 0x400, scoped, tag = 'output window, operand 2, single buffered']
    %16 = vsyncpa [#allocation4], 0
    %17 = vsyncpa [#allocation7], 0
    %18 = vsyncpa [#allocation5], 0
    %19 = vsyncpa [#allocation11], 0
    // Predicated region
    $region2: #{tpu_custom_call.1} parent=1 // pred_check
      _
    $region3: #{tpu_custom_call.1} parent=1 // pred_check_branch
      %21 = sbr.rel (0) target = $region5
    $region4: #{tpu_custom_call.1} parent=1 // pred_region
      _
    $region5: #{tpu_custom_call.1} parent=1 // pred_fallthru
      _
    // Predicated region
    $region6: #{tpu_custom_call.1} parent=1 // pred_check
      _
    $region7: #{tpu_custom_call.1} parent=1 // pred_check_branch
      %23 = sbr.rel (0) target = $region9
    $region8: #{tpu_custom_call.1} parent=1 // pred_region
      _
    $region9: #{tpu_custom_call.1} parent=1 // pred_fallthru
      _
    // Predicated region
    $region10: #{tpu_custom_call.1} parent=1 // pred_check
      _
    $region11: #{tpu_custom_call.1} parent=1 // pred_check_branch
      %25 = sbr.rel (0) target = $region13
    $region12: #{tpu_custom_call.1} parent=1 // pred_region
      _
    $region13: #{tpu_custom_call.1} parent=1 // pred_fallthru
      _
    // Predicated region
    $region14: #{tpu_custom_call.1} parent=1 // pred_check
      _
    $region15: #{tpu_custom_call.1} parent=1 // pred_check_branch
      %27 = sbr.rel (0) target = $region17
    $region16: #{tpu_custom_call.1} parent=1 // pred_region
      %s29 = ssub.s32 512, 512
      %30 = vsyncadd [#allocation4], %s29
      %s31 = sshll.u32 [#allocation3], 4
      %s32 = int_to_ptr.vmem [resolvable:$true] %s31
      %37 = dma.hbm_to_vmem [thread:$0]  %s3, 512, %s32, [#allocation4], 128, 128, 8
    $region17: #{tpu_custom_call.1} parent=1 // pred_fallthru
      _
    // Predicated region
    $region18: #{tpu_custom_call.1} parent=1 // pred_check
      _
    $region19: #{tpu_custom_call.1} parent=1 // pred_check_branch
      %39 = sbr.rel (0) target = $region21
    $region20: #{tpu_custom_call.1} parent=1 // pred_region
      %s41 = ssub.s32 512, 512
      %42 = vsyncadd [#allocation7], %s41
      %s43 = sshll.u32 [#allocation6], 4
      %s44 = int_to_ptr.vmem [resolvable:$true] %s43
      %49 = dma.hbm_to_vmem [thread:$0]  %s4, 512, %s44, [#allocation7], 128, 128, 8
    $region21: #{tpu_custom_call.1} parent=1 // pred_fallthru
      _
    // Predicated region
    $region22: #{tpu_custom_call.1} parent=1 // pred_check
      _
    $region23: #{tpu_custom_call.1} parent=1 // pred_check_branch
      %51 = sbr.rel (0) target = $region25
    $region24: #{tpu_custom_call.1} parent=1 // pred_region
      _
    $region25: #{tpu_custom_call.1} parent=1 // pred_fallthru
      _
    // Predicated region
    $region26: #{tpu_custom_call.1} parent=1 // pred_check
      _
    $region27: #{tpu_custom_call.1} parent=1 // pred_check_branch
      %53 = sbr.rel (0) target = $region29
    $region28: #{tpu_custom_call.1} parent=1 // pred_region
      %s55 = ssub.s32 512, 512
      %56 = vsyncadd [#allocation7], %s55
      %s57 = sshll.u32 [#allocation8], 4
      %s58 = int_to_ptr.vmem [resolvable:$true] %s57
      %63 = dma.hbm_to_vmem [thread:$0]  %s6, 512, %s58, [#allocation7], 128, 128, 8
    $region29: #{tpu_custom_call.1} parent=1 // pred_fallthru
      _
    // Predicated region
    $region30: #{tpu_custom_call.1} parent=1 // pred_check
      _
    $region31: #{tpu_custom_call.1} parent=1 // pred_check_branch
      %65 = sbr.rel (0) target = $region33
    $region32: #{tpu_custom_call.1} parent=1 // pred_region
      _
    $region33: #{tpu_custom_call.1} parent=1 // pred_fallthru
      _
    // Predicated region
    $region34: #{tpu_custom_call.1} parent=1 // pred_check
      _
    $region35: #{tpu_custom_call.1} parent=1 // pred_check_branch
      %67 = sbr.rel (0) target = $region37
    $region36: #{tpu_custom_call.1} parent=1 // pred_region
      %68 = dma.done [#allocation4], 512
    $region37: #{tpu_custom_call.1} parent=1 // pred_fallthru
      _
    // Predicated region
    $region38: #{tpu_custom_call.1} parent=1 // pred_check
      _
    $region39: #{tpu_custom_call.1} parent=1 // pred_check_branch
      %70 = sbr.rel (0) target = $region41
    $region40: #{tpu_custom_call.1} parent=1 // pred_region
      %71 = dma.done [#allocation7], 512
    $region41: #{tpu_custom_call.1} parent=1 // pred_fallthru
      _
    // Predicated region
    $region42: #{tpu_custom_call.1} parent=1 // pred_check
      _
    $region43: #{tpu_custom_call.1} parent=1 // pred_check_branch
      %73 = sbr.rel (0) target = $region45
    $region44: #{tpu_custom_call.1} parent=1 // pred_region
      %74 = dma.done [#allocation7], 512
    $region45: #{tpu_custom_call.1} parent=1 // pred_fallthru
      _
    %v75 = vld [vmem:[%s0] sm:$0xff]
    %v76 = vld [vmem:[%s0 + $0x8] sm:$0xff]
    %v77 = vlaneseq
    %v78 = vand.u32 %v77, 127
    %79 = vset.pattern.permute.xlu0 0
    %80 = vperm.xlu0 %79, %v75
    %v81 = vpop.permute.xlu0 %80
    %82 = vset.pattern.permute.xlu0 0
    %83 = vperm.xlu0 %82, %v76
    %v84 = vpop.permute.xlu0 %83
    %vm85 = vcmp.eq.s32.totalorder %v78, %v81
    %vm86 = vcmp.eq.s32.totalorder %v78, %v84
    %v87 = vsel %vm85, 1, 0
    %v88 = vsel %vm86, 1, 0
    %v89 = vcvt.s32.f32 %v87
    %v90 = vcvt.s32.f32 %v88
    %v91 = vld [vmem:[#allocation3] sm:$0xff]
    %v92 = vld [vmem:[#allocation3 + $0x8] sm:$0xff]
    %v93 = vld [vmem:[#allocation3 + $0x10] sm:$0xff]
    %v94 = vld [vmem:[#allocation3 + $0x18] sm:$0xff]
    %v95 = vld [vmem:[%s5] sm:$0x1]
    %v97 = vlaneseq
    %v98 = vshrl.u32 %v97, 7
    %v99 = vsub.s32 0, %v98
    %v100 = vrot.slane %v95, %v99
    %vm102 = vcmask 261120
    %v104 = vsel %vm102, %v89, 0
    %v107 = vsel %vm102, %v90, 0
    %109 = vmatprep.subr.mxu0 0.0
    %110 = vmatpush1.msra.mxu0 0.0
    %111 = vmatprep.subr.mxu0 0.0
    %112 = vmatpush1.msra.mxu0 0.0
    %113 = vmatprep.subr.mxu0 0.0
    %114 = vmatpush1.msra.mxu0 0.0
    %115 = vmatprep.subr.mxu0 0.0
    %116 = vmatpush1.msra.mxu0 0.0
    %117 = vmatprep.subr.mxu0 0.0
    %118 = vmatpush1.msra.mxu0 0.0
    %119 = vmatprep.subr.mxu0 0.0
    %120 = vmatpush1.msra.mxu0 0.0
    %121 = vmatprep.subr.mxu0 0.0
    %122 = vmatpush1.msra.mxu0 0.0
    %123 = vmatprep.subr.mxu0 0.0
    %124 = vmatpush1.msra.mxu0 0.0
    %125 = vmatprep.subr.mxu0 0.0
    %126 = vmatpush1.msra.mxu0 0.0
    %127 = vmatprep.subr.mxu0 0.0
    %128 = vmatpush1.msra.mxu0 0.0
    %129 = vmatprep.subr.mxu0 0.0
    %130 = vmatpush1.msra.mxu0 0.0
    %131 = vmatprep.subr.mxu0 0.0
    %132 = vmatpush1.msra.mxu0 0.0
    %133 = vmatprep.subr.mxu0 0.0
    %134 = vmatpush1.msra.mxu0 %v94
    %135 = vmatprep.subr.mxu0 0.0
    %136 = vmatpush1.msra.mxu0 %v93
    %137 = vmatprep.subr.mxu0 0.0
    %138 = vmatpush1.msra.mxu0 %v92
    %139 = vmatprep.subr.mxu0 0.0
    %140 = vmatpush1.msra.mxu0 %v91
    %141 = vmatprep.subr.mxu0 0.0
    %142 = vmatpush2.msra.mxu0 0.0
    %143 = vmatprep.subr.mxu0 0.0
    %144 = vmatpush2.msra.mxu0 0.0
    %145 = vmatprep.subr.mxu0 0.0
    %146 = vmatpush2.msra.mxu0 0.0
    %147 = vmatprep.subr.mxu0 0.0
    %148 = vmatpush2.msra.mxu0 0.0
    %149 = vmatprep.subr.mxu0 0.0
    %150 = vmatpush2.msra.mxu0 0.0
    %151 = vmatprep.subr.mxu0 0.0
    %152 = vmatpush2.msra.mxu0 0.0
    %153 = vmatprep.subr.mxu0 0.0
    %154 = vmatpush2.msra.mxu0 0.0
    %155 = vmatprep.subr.mxu0 0.0
    %156 = vmatpush2.msra.mxu0 0.0
    %157 = vmatprep.subr.mxu0 0.0
    %158 = vmatpush2.msra.mxu0 0.0
    %159 = vmatprep.subr.mxu0 0.0
    %160 = vmatpush2.msra.mxu0 0.0
    %161 = vmatprep.subr.mxu0 0.0
    %162 = vmatpush2.msra.mxu0 0.0
    %163 = vmatprep.subr.mxu0 0.0
    %164 = vmatpush2.msra.mxu0 0.0
    %165 = vmatprep.subr.mxu0 0.0
    %166 = vmatpush2.msra.mxu0 0.0
    %167 = vmatprep.subr.mxu0 0.0
    %168 = vmatpush2.msra.mxu0 0.0
    %169 = vmatprep.subr.mxu0 0.0
    %170 = vmatpush2.msra.mxu0 0.0
    %171 = vmatprep.subr.mxu0 0.0
    %172 = vmatpush2.msra.mxu0 0.0
    %173 = vmatprep.mubr.f32.mxu0 0.0
    %174 = vmatmul.mubr.f32.gmra.mxu0 %v104
    %v175 = vpop.f32.mrf.mxu0
    %v176 = vadd.f32 %v100, %v175
    %v177 = vpop.f32.mrf.mxu0
    %178 = vmatprep.mubr.f32.mxu0 0.0
    %179 = vmatmul.mubr.f32.gmra.mxu0 %v107
    %v180 = vpop.f32.mrf.mxu0
    %v181 = vadd.f32 %v100, %v180
    %v182 = vpop.f32.mrf.mxu0
    %183 = vdwg.mxu0
    %v184 = vld [vmem:[#allocation6] sm:$0xff]
    %v185 = vld [vmem:[#allocation6 + $0x8] sm:$0xff]
    %v186 = vld [vmem:[#allocation6 + $0x10] sm:$0xff]
    %v187 = vld [vmem:[#allocation6 + $0x18] sm:$0xff]
    %v188 = vld [vmem:[%s1] sm:$0x3]
    %v189 = vld [vmem:[%s2] sm:$0x3]
    %v191 = vsel %vm102, %v188, 0
    %193 = vmatprep.subr.mxu0 0.0
    %194 = vmatpush1.msra.mxu0 0.0
    %195 = vmatprep.subr.mxu0 0.0
    %196 = vmatpush1.msra.mxu0 0.0
    %197 = vmatprep.subr.mxu0 0.0
    %198 = vmatpush1.msra.mxu0 0.0
    %199 = vmatprep.subr.mxu0 0.0
    %200 = vmatpush1.msra.mxu0 0.0
    %201 = vmatprep.subr.mxu0 0.0
    %202 = vmatpush1.msra.mxu0 0.0
    %203 = vmatprep.subr.mxu0 0.0
    %204 = vmatpush1.msra.mxu0 0.0
    %205 = vmatprep.subr.mxu0 0.0
    %206 = vmatpush1.msra.mxu0 0.0
    %207 = vmatprep.subr.mxu0 0.0
    %208 = vmatpush1.msra.mxu0 0.0
    %209 = vmatprep.subr.mxu0 0.0
    %210 = vmatpush1.msra.mxu0 0.0
    %211 = vmatprep.subr.mxu0 0.0
    %212 = vmatpush1.msra.mxu0 0.0
    %213 = vmatprep.subr.mxu0 0.0
    %214 = vmatpush1.msra.mxu0 0.0
    %215 = vmatprep.subr.mxu0 0.0
    %216 = vmatpush1.msra.mxu0 0.0
    %217 = vmatprep.subr.mxu0 0.0
    %218 = vmatpush1.msra.mxu0 %v187
    %219 = vmatprep.subr.mxu0 0.0
    %220 = vmatpush1.msra.mxu0 %v186
    %221 = vmatprep.subr.mxu0 0.0
    %222 = vmatpush1.msra.mxu0 %v185
    %223 = vmatprep.subr.mxu0 0.0
    %224 = vmatpush1.msra.mxu0 %v184
    %225 = vmatprep.subr.mxu0 0.0
    %226 = vmatpush2.msra.mxu0 0.0
    %227 = vmatprep.subr.mxu0 0.0
    %228 = vmatpush2.msra.mxu0 0.0
    %229 = vmatprep.subr.mxu0 0.0
    %230 = vmatpush2.msra.mxu0 0.0
    %231 = vmatprep.subr.mxu0 0.0
    %232 = vmatpush2.msra.mxu0 0.0
    %233 = vmatprep.subr.mxu0 0.0
    %234 = vmatpush2.msra.mxu0 0.0
    %235 = vmatprep.subr.mxu0 0.0
    %236 = vmatpush2.msra.mxu0 0.0
    %237 = vmatprep.subr.mxu0 0.0
    %238 = vmatpush2.msra.mxu0 0.0
    %239 = vmatprep.subr.mxu0 0.0
    %240 = vmatpush2.msra.mxu0 0.0
    %241 = vmatprep.subr.mxu0 0.0
    %242 = vmatpush2.msra.mxu0 0.0
    %243 = vmatprep.subr.mxu0 0.0
    %244 = vmatpush2.msra.mxu0 0.0
    %245 = vmatprep.subr.mxu0 0.0
    %246 = vmatpush2.msra.mxu0 0.0
    %247 = vmatprep.subr.mxu0 0.0
    %248 = vmatpush2.msra.mxu0 0.0
    %249 = vmatprep.subr.mxu0 0.0
    %250 = vmatpush2.msra.mxu0 0.0
    %251 = vmatprep.subr.mxu0 0.0
    %252 = vmatpush2.msra.mxu0 0.0
    %253 = vmatprep.subr.mxu0 0.0
    %254 = vmatpush2.msra.mxu0 0.0
    %255 = vmatprep.subr.mxu0 0.0
    %256 = vmatpush2.msra.mxu0 0.0
    %257 = vmatprep.mubr.f32.mxu0 0.0
    %258 = vmatmul.mubr.f32.gmra.mxu0 %v191
    %v259 = vpop.f32.mrf.mxu0
    %v260 = vadd.f32 0.0, %v259
    %v261 = vpop.f32.mrf.mxu0
    %262 = vdwg.mxu0
    %v263 = vadd.f32 %v176, %v260
    %v264 = vxor.u32 %v263, 2147483648
    %v265 = vmul.f32 %v264, 1.442695
    %v266 = vpow.pop %v265
    %v267 = vadd.f32 %v266, 1.0
    %v268 = vrcp.pop %v267
    %v269 = vmul.f32 1.0, %v268
    %v270 = vtanh.pop %v263
    %272 = vrot.lane.b32.xlu0 %v189, 32
    %v273 = vpop.permute.xlu0 %272
    %v275 = vmul.f32 %v269, %v273
    %277 = vrot.lane.b32.xlu0 %v270, 64
    %v278 = vpop.permute.xlu0 %277
    %v280 = vmul.f32 %v269, %v278
    %282 = vrot.lane.b32.xlu0 %v280, 32
    %v283 = vpop.permute.xlu0 %282
    %v285 = vadd.f32 %v275, %v283
    %v286 = vtanh.pop %v285
    %288 = vrot.lane.b32.xlu0 %v286, 64
    %v289 = vpop.permute.xlu0 %288
    %v291 = vmul.f32 %v269, %v289
    %293 = vrot.lane.b32.xlu0 %v291, 32
    %v294 = vpop.permute.xlu0 %293
    %vm296 = vcmask 254976
    %297 = vst.msk [vmem:[#allocation2] sm:$0x3] %vm296, %v294
    %v298 = vsel %vm102, %v294, 0
    %300 = vmatprep.subr.mxu0 0.0
    %301 = vmatpush1.msra.mxu0 0.0
    %302 = vmatprep.subr.mxu0 0.0
    %303 = vmatpush1.msra.mxu0 0.0
    %304 = vmatprep.subr.mxu0 0.0
    %305 = vmatpush1.msra.mxu0 0.0
    %306 = vmatprep.subr.mxu0 0.0
    %307 = vmatpush1.msra.mxu0 0.0
    %308 = vmatprep.subr.mxu0 0.0
    %309 = vmatpush1.msra.mxu0 0.0
    %310 = vmatprep.subr.mxu0 0.0
    %311 = vmatpush1.msra.mxu0 0.0
    %312 = vmatprep.subr.mxu0 0.0
    %313 = vmatpush1.msra.mxu0 0.0
    %314 = vmatprep.subr.mxu0 0.0
    %315 = vmatpush1.msra.mxu0 0.0
    %316 = vmatprep.subr.mxu0 0.0
    %317 = vmatpush1.msra.mxu0 0.0
    %318 = vmatprep.subr.mxu0 0.0
    %319 = vmatpush1.msra.mxu0 0.0
    %320 = vmatprep.subr.mxu0 0.0
    %321 = vmatpush1.msra.mxu0 0.0
    %322 = vmatprep.subr.mxu0 0.0
    %323 = vmatpush1.msra.mxu0 0.0
    %324 = vmatprep.subr.mxu0 0.0
    %325 = vmatpush1.msra.mxu0 %v187
    %326 = vmatprep.subr.mxu0 0.0
    %327 = vmatpush1.msra.mxu0 %v186
    %328 = vmatprep.subr.mxu0 0.0
    %329 = vmatpush1.msra.mxu0 %v185
    %330 = vmatprep.subr.mxu0 0.0
    %331 = vmatpush1.msra.mxu0 %v184
    %332 = vmatprep.subr.mxu0 0.0
    %333 = vmatpush2.msra.mxu0 0.0
    %334 = vmatprep.subr.mxu0 0.0
    %335 = vmatpush2.msra.mxu0 0.0
    %336 = vmatprep.subr.mxu0 0.0
    %337 = vmatpush2.msra.mxu0 0.0
    %338 = vmatprep.subr.mxu0 0.0
    %339 = vmatpush2.msra.mxu0 0.0
    %340 = vmatprep.subr.mxu0 0.0
    %341 = vmatpush2.msra.mxu0 0.0
    %342 = vmatprep.subr.mxu0 0.0
    %343 = vmatpush2.msra.mxu0 0.0
    %344 = vmatprep.subr.mxu0 0.0
    %345 = vmatpush2.msra.mxu0 0.0
    %346 = vmatprep.subr.mxu0 0.0
    %347 = vmatpush2.msra.mxu0 0.0
    %348 = vmatprep.subr.mxu0 0.0
    %349 = vmatpush2.msra.mxu0 0.0
    %350 = vmatprep.subr.mxu0 0.0
    %351 = vmatpush2.msra.mxu0 0.0
    %352 = vmatprep.subr.mxu0 0.0
    %353 = vmatpush2.msra.mxu0 0.0
    %354 = vmatprep.subr.mxu0 0.0
    %355 = vmatpush2.msra.mxu0 0.0
    %356 = vmatprep.subr.mxu0 0.0
    %357 = vmatpush2.msra.mxu0 0.0
    %358 = vmatprep.subr.mxu0 0.0
    %359 = vmatpush2.msra.mxu0 0.0
    %360 = vmatprep.subr.mxu0 0.0
    %361 = vmatpush2.msra.mxu0 0.0
    %362 = vmatprep.subr.mxu0 0.0
    %363 = vmatpush2.msra.mxu0 0.0
    %364 = vmatprep.mubr.f32.mxu0 0.0
    %365 = vmatmul.mubr.f32.gmra.mxu0 %v298
    %v366 = vpop.f32.mrf.mxu0
    %v367 = vadd.f32 0.0, %v366
    %v368 = vpop.f32.mrf.mxu0
    %369 = vdwg.mxu0
    %v371 = vrot.slane %v367, 6
    %v373 = vadd.f32 %v176, %v371
    %v374 = vxor.u32 %v373, 2147483648
    %v375 = vmul.f32 %v374, 1.442695
    %v376 = vpow.pop %v375
    %v377 = vadd.f32 %v376, 1.0
    %v378 = vrcp.pop %v377
    %v379 = vmul.f32 1.0, %v378
    %v380 = vtanh.pop %v373
    %v382 = vrot.slane %v285, 6
    %v384 = vmul.f32 %v379, %v382
    %386 = vrot.lane.b32.xlu0 %v380, 64
    %v387 = vpop.permute.xlu0 %386
    %v389 = vmul.f32 %v379, %v387
    %391 = vrot.lane.b32.xlu0 %v389, 32
    %v392 = vpop.permute.xlu0 %391
    %v394 = vadd.f32 %v384, %v392
    %v395 = vtanh.pop %v394
    %397 = vrot.lane.b32.xlu0 %v395, 64
    %v398 = vpop.permute.xlu0 %397
    %v400 = vmul.f32 %v379, %v398
    %402 = vrot.lane.b32.xlu0 %v400, 32
    %v403 = vpop.permute.xlu0 %402
    %vm405 = vcmask 257026
    %406 = vst.msk [vmem:[#allocation2] sm:$0xc] %vm405, %v403
    %v407 = vrot.slane %v400, 2
    %408 = vrot.lane.b32.xlu0 %v407, 32
    %v409 = vpop.permute.xlu0 %408
    %v410 = vsel %vm102, %v409, 0
    %412 = vmatprep.subr.mxu0 0.0
    %413 = vmatpush1.msra.mxu0 0.0
    %414 = vmatprep.subr.mxu0 0.0
    %415 = vmatpush1.msra.mxu0 0.0
    %416 = vmatprep.subr.mxu0 0.0
    %417 = vmatpush1.msra.mxu0 0.0
    %418 = vmatprep.subr.mxu0 0.0
    %419 = vmatpush1.msra.mxu0 0.0
    %420 = vmatprep.subr.mxu0 0.0
    %421 = vmatpush1.msra.mxu0 0.0
    %422 = vmatprep.subr.mxu0 0.0
    %423 = vmatpush1.msra.mxu0 0.0
    %424 = vmatprep.subr.mxu0 0.0
    %425 = vmatpush1.msra.mxu0 0.0
    %426 = vmatprep.subr.mxu0 0.0
    %427 = vmatpush1.msra.mxu0 0.0
    %428 = vmatprep.subr.mxu0 0.0
    %429 = vmatpush1.msra.mxu0 0.0
    %430 = vmatprep.subr.mxu0 0.0
    %431 = vmatpush1.msra.mxu0 0.0
    %432 = vmatprep.subr.mxu0 0.0
    %433 = vmatpush1.msra.mxu0 0.0
    %434 = vmatprep.subr.mxu0 0.0
    %435 = vmatpush1.msra.mxu0 0.0
    %436 = vmatprep.subr.mxu0 0.0
    %437 = vmatpush1.msra.mxu0 %v187
    %438 = vmatprep.subr.mxu0 0.0
    %439 = vmatpush1.msra.mxu0 %v186
    %440 = vmatprep.subr.mxu0 0.0
    %441 = vmatpush1.msra.mxu0 %v185
    %442 = vmatprep.subr.mxu0 0.0
    %443 = vmatpush1.msra.mxu0 %v184
    %444 = vmatprep.subr.mxu0 0.0
    %445 = vmatpush2.msra.mxu0 0.0
    %446 = vmatprep.subr.mxu0 0.0
    %447 = vmatpush2.msra.mxu0 0.0
    %448 = vmatprep.subr.mxu0 0.0
    %449 = vmatpush2.msra.mxu0 0.0
    %450 = vmatprep.subr.mxu0 0.0
    %451 = vmatpush2.msra.mxu0 0.0
    %452 = vmatprep.subr.mxu0 0.0
    %453 = vmatpush2.msra.mxu0 0.0
    %454 = vmatprep.subr.mxu0 0.0
    %455 = vmatpush2.msra.mxu0 0.0
    %456 = vmatprep.subr.mxu0 0.0
    %457 = vmatpush2.msra.mxu0 0.0
    %458 = vmatprep.subr.mxu0 0.0
    %459 = vmatpush2.msra.mxu0 0.0
    %460 = vmatprep.subr.mxu0 0.0
    %461 = vmatpush2.msra.mxu0 0.0
    %462 = vmatprep.subr.mxu0 0.0
    %463 = vmatpush2.msra.mxu0 0.0
    %464 = vmatprep.subr.mxu0 0.0
    %465 = vmatpush2.msra.mxu0 0.0
    %466 = vmatprep.subr.mxu0 0.0
    %467 = vmatpush2.msra.mxu0 0.0
    %468 = vmatprep.subr.mxu0 0.0
    %469 = vmatpush2.msra.mxu0 0.0
    %470 = vmatprep.subr.mxu0 0.0
    %471 = vmatpush2.msra.mxu0 0.0
    %472 = vmatprep.subr.mxu0 0.0
    %473 = vmatpush2.msra.mxu0 0.0
    %474 = vmatprep.subr.mxu0 0.0
    %475 = vmatpush2.msra.mxu0 0.0
    %476 = vmatprep.mubr.f32.mxu0 0.0
    %477 = vmatmul.mubr.f32.gmra.mxu0 %v410
    %v478 = vpop.f32.mrf.mxu0
    %v479 = vadd.f32 0.0, %v478
    %v480 = vpop.f32.mrf.mxu0
    %481 = vdwg.mxu0
    %v483 = vrot.slane %v479, 4
    %v485 = vadd.f32 %v176, %v483
    %v486 = vxor.u32 %v485, 2147483648
    %v487 = vmul.f32 %v486, 1.442695
    %v488 = vpow.pop %v487
    %v489 = vadd.f32 %v488, 1.0
    %v490 = vrcp.pop %v489
    %v491 = vmul.f32 1.0, %v490
    %v492 = vtanh.pop %v485
    %v494 = vrot.slane %v394, 6
    %v496 = vmul.f32 %v491, %v494
    %498 = vrot.lane.b32.xlu0 %v492, 64
    %v499 = vpop.permute.xlu0 %498
    %v501 = vmul.f32 %v491, %v499
    %503 = vrot.lane.b32.xlu0 %v501, 32
    %v504 = vpop.permute.xlu0 %503
    %v506 = vadd.f32 %v496, %v504
    %v507 = vtanh.pop %v506
    %509 = vrot.lane.b32.xlu0 %v507, 64
    %v510 = vpop.permute.xlu0 %509
    %v512 = vmul.f32 %v491, %v510
    %514 = vrot.lane.b32.xlu0 %v512, 32
    %v515 = vpop.permute.xlu0 %514
    %vm517 = vcmask 259076
    %518 = vst.msk [vmem:[#allocation2] sm:$0x30] %vm517, %v515
    %v519 = vrot.slane %v512, 4
    %520 = vrot.lane.b32.xlu0 %v519, 32
    %v521 = vpop.permute.xlu0 %520
    %v522 = vsel %vm102, %v521, 0
    %524 = vmatprep.subr.mxu0 0.0
    %525 = vmatpush1.msra.mxu0 0.0
    %526 = vmatprep.subr.mxu0 0.0
    %527 = vmatpush1.msra.mxu0 0.0
    %528 = vmatprep.subr.mxu0 0.0
    %529 = vmatpush1.msra.mxu0 0.0
    %530 = vmatprep.subr.mxu0 0.0
    %531 = vmatpush1.msra.mxu0 0.0
    %532 = vmatprep.subr.mxu0 0.0
    %533 = vmatpush1.msra.mxu0 0.0
    %534 = vmatprep.subr.mxu0 0.0
    %535 = vmatpush1.msra.mxu0 0.0
    %536 = vmatprep.subr.mxu0 0.0
    %537 = vmatpush1.msra.mxu0 0.0
    %538 = vmatprep.subr.mxu0 0.0
    %539 = vmatpush1.msra.mxu0 0.0
    %540 = vmatprep.subr.mxu0 0.0
    %541 = vmatpush1.msra.mxu0 0.0
    %542 = vmatprep.subr.mxu0 0.0
    %543 = vmatpush1.msra.mxu0 0.0
    %544 = vmatprep.subr.mxu0 0.0
    %545 = vmatpush1.msra.mxu0 0.0
    %546 = vmatprep.subr.mxu0 0.0
    %547 = vmatpush1.msra.mxu0 0.0
    %548 = vmatprep.subr.mxu0 0.0
    %549 = vmatpush1.msra.mxu0 %v187
    %550 = vmatprep.subr.mxu0 0.0
    %551 = vmatpush1.msra.mxu0 %v186
    %552 = vmatprep.subr.mxu0 0.0
    %553 = vmatpush1.msra.mxu0 %v185
    %554 = vmatprep.subr.mxu0 0.0
    %555 = vmatpush1.msra.mxu0 %v184
    %556 = vmatprep.subr.mxu0 0.0
    %557 = vmatpush2.msra.mxu0 0.0
    %558 = vmatprep.subr.mxu0 0.0
    %559 = vmatpush2.msra.mxu0 0.0
    %560 = vmatprep.subr.mxu0 0.0
    %561 = vmatpush2.msra.mxu0 0.0
    %562 = vmatprep.subr.mxu0 0.0
    %563 = vmatpush2.msra.mxu0 0.0
    %564 = vmatprep.subr.mxu0 0.0
    %565 = vmatpush2.msra.mxu0 0.0
    %566 = vmatprep.subr.mxu0 0.0
    %567 = vmatpush2.msra.mxu0 0.0
    %568 = vmatprep.subr.mxu0 0.0
    %569 = vmatpush2.msra.mxu0 0.0
    %570 = vmatprep.subr.mxu0 0.0
    %571 = vmatpush2.msra.mxu0 0.0
    %572 = vmatprep.subr.mxu0 0.0
    %573 = vmatpush2.msra.mxu0 0.0
    %574 = vmatprep.subr.mxu0 0.0
    %575 = vmatpush2.msra.mxu0 0.0
    %576 = vmatprep.subr.mxu0 0.0
    %577 = vmatpush2.msra.mxu0 0.0
    %578 = vmatprep.subr.mxu0 0.0
    %579 = vmatpush2.msra.mxu0 0.0
    %580 = vmatprep.subr.mxu0 0.0
    %581 = vmatpush2.msra.mxu0 0.0
    %582 = vmatprep.subr.mxu0 0.0
    %583 = vmatpush2.msra.mxu0 0.0
    %584 = vmatprep.subr.mxu0 0.0
    %585 = vmatpush2.msra.mxu0 0.0
    %586 = vmatprep.subr.mxu0 0.0
    %587 = vmatpush2.msra.mxu0 0.0
    %588 = vmatprep.mubr.f32.mxu0 0.0
    %589 = vmatmul.mubr.f32.gmra.mxu0 %v522
    %v590 = vpop.f32.mrf.mxu0
    %v591 = vadd.f32 0.0, %v590
    %v592 = vpop.f32.mrf.mxu0
    %593 = vdwg.mxu0
    %v595 = vrot.slane %v591, 2
    %v597 = vadd.f32 %v176, %v595
    %v598 = vxor.u32 %v597, 2147483648
    %v599 = vmul.f32 %v598, 1.442695
    %v600 = vpow.pop %v599
    %v601 = vadd.f32 %v600, 1.0
    %v602 = vrcp.pop %v601
    %v603 = vmul.f32 1.0, %v602
    %v604 = vtanh.pop %v597
    %v606 = vrot.slane %v506, 6
    %v608 = vmul.f32 %v603, %v606
    %610 = vrot.lane.b32.xlu0 %v604, 64
    %v611 = vpop.permute.xlu0 %610
    %v613 = vmul.f32 %v603, %v611
    %615 = vrot.lane.b32.xlu0 %v613, 32
    %v616 = vpop.permute.xlu0 %615
    %v618 = vadd.f32 %v608, %v616
    %v619 = vtanh.pop %v618
    %621 = vrot.lane.b32.xlu0 %v619, 64
    %v622 = vpop.permute.xlu0 %621
    %v624 = vmul.f32 %v603, %v622
    %626 = vrot.lane.b32.xlu0 %v624, 32
    %v627 = vpop.permute.xlu0 %626
    %vm629 = vcmask 261126
    %630 = vst.msk [vmem:[#allocation2] sm:$0xc0] %vm629, %v627
    %v631 = vrot.slane %v624, 6
    %632 = vrot.lane.b32.xlu0 %v631, 32
    %v633 = vpop.permute.xlu0 %632
    %v634 = vsel %vm102, %v633, 0
    %636 = vmatprep.subr.mxu0 0.0
    %637 = vmatpush1.msra.mxu0 0.0
    %638 = vmatprep.subr.mxu0 0.0
    %639 = vmatpush1.msra.mxu0 0.0
    %640 = vmatprep.subr.mxu0 0.0
    %641 = vmatpush1.msra.mxu0 0.0
    %642 = vmatprep.subr.mxu0 0.0
    %643 = vmatpush1.msra.mxu0 0.0
    %644 = vmatprep.subr.mxu0 0.0
    %645 = vmatpush1.msra.mxu0 0.0
    %646 = vmatprep.subr.mxu0 0.0
    %647 = vmatpush1.msra.mxu0 0.0
    %648 = vmatprep.subr.mxu0 0.0
    %649 = vmatpush1.msra.mxu0 0.0
    %650 = vmatprep.subr.mxu0 0.0
    %651 = vmatpush1.msra.mxu0 0.0
    %652 = vmatprep.subr.mxu0 0.0
    %653 = vmatpush1.msra.mxu0 0.0
    %654 = vmatprep.subr.mxu0 0.0
    %655 = vmatpush1.msra.mxu0 0.0
    %656 = vmatprep.subr.mxu0 0.0
    %657 = vmatpush1.msra.mxu0 0.0
    %658 = vmatprep.subr.mxu0 0.0
    %659 = vmatpush1.msra.mxu0 0.0
    %660 = vmatprep.subr.mxu0 0.0
    %661 = vmatpush1.msra.mxu0 %v187
    %662 = vmatprep.subr.mxu0 0.0
    %663 = vmatpush1.msra.mxu0 %v186
    %664 = vmatprep.subr.mxu0 0.0
    %665 = vmatpush1.msra.mxu0 %v185
    %666 = vmatprep.subr.mxu0 0.0
    %667 = vmatpush1.msra.mxu0 %v184
    %668 = vmatprep.subr.mxu0 0.0
    %669 = vmatpush2.msra.mxu0 0.0
    %670 = vmatprep.subr.mxu0 0.0
    %671 = vmatpush2.msra.mxu0 0.0
    %672 = vmatprep.subr.mxu0 0.0
    %673 = vmatpush2.msra.mxu0 0.0
    %674 = vmatprep.subr.mxu0 0.0
    %675 = vmatpush2.msra.mxu0 0.0
    %676 = vmatprep.subr.mxu0 0.0
    %677 = vmatpush2.msra.mxu0 0.0
    %678 = vmatprep.subr.mxu0 0.0
    %679 = vmatpush2.msra.mxu0 0.0
    %680 = vmatprep.subr.mxu0 0.0
    %681 = vmatpush2.msra.mxu0 0.0
    %682 = vmatprep.subr.mxu0 0.0
    %683 = vmatpush2.msra.mxu0 0.0
    %684 = vmatprep.subr.mxu0 0.0
    %685 = vmatpush2.msra.mxu0 0.0
    %686 = vmatprep.subr.mxu0 0.0
    %687 = vmatpush2.msra.mxu0 0.0
    %688 = vmatprep.subr.mxu0 0.0
    %689 = vmatpush2.msra.mxu0 0.0
    %690 = vmatprep.subr.mxu0 0.0
    %691 = vmatpush2.msra.mxu0 0.0
    %692 = vmatprep.subr.mxu0 0.0
    %693 = vmatpush2.msra.mxu0 0.0
    %694 = vmatprep.subr.mxu0 0.0
    %695 = vmatpush2.msra.mxu0 0.0
    %696 = vmatprep.subr.mxu0 0.0
    %697 = vmatpush2.msra.mxu0 0.0
    %698 = vmatprep.subr.mxu0 0.0
    %699 = vmatpush2.msra.mxu0 0.0
    %700 = vmatprep.mubr.f32.mxu0 0.0
    %701 = vmatmul.mubr.f32.gmra.mxu0 %v634
    %v702 = vpop.f32.mrf.mxu0
    %v703 = vadd.f32 0.0, %v702
    %v704 = vpop.f32.mrf.mxu0
    %705 = vdwg.mxu0
    %v706 = vadd.f32 %v181, %v703
    %v707 = vxor.u32 %v706, 2147483648
    %v708 = vmul.f32 %v707, 1.442695
    %v709 = vpow.pop %v708
    %v710 = vadd.f32 %v709, 1.0
    %v711 = vrcp.pop %v710
    %v712 = vmul.f32 1.0, %v711
    %v713 = vtanh.pop %v706
    %v715 = vrot.slane %v618, 6
    %v717 = vmul.f32 %v712, %v715
    %719 = vrot.lane.b32.xlu0 %v713, 64
    %v720 = vpop.permute.xlu0 %719
    %v722 = vmul.f32 %v712, %v720
    %724 = vrot.lane.b32.xlu0 %v722, 32
    %v725 = vpop.permute.xlu0 %724
    %v727 = vadd.f32 %v717, %v725
    %v728 = vtanh.pop %v727
    %730 = vrot.lane.b32.xlu0 %v728, 64
    %v731 = vpop.permute.xlu0 %730
    %v733 = vmul.f32 %v712, %v731
    %735 = vrot.lane.b32.xlu0 %v733, 32
    %v736 = vpop.permute.xlu0 %735
    %738 = vst.msk [vmem:[#allocation2 + $0x8] sm:$0x3] %vm296, %v736
    %v739 = vsel %vm102, %v736, 0
    %741 = vmatprep.subr.mxu0 0.0
    %742 = vmatpush1.msra.mxu0 0.0
    %743 = vmatprep.subr.mxu0 0.0
    %744 = vmatpush1.msra.mxu0 0.0
    %745 = vmatprep.subr.mxu0 0.0
    %746 = vmatpush1.msra.mxu0 0.0
    %747 = vmatprep.subr.mxu0 0.0
    %748 = vmatpush1.msra.mxu0 0.0
    %749 = vmatprep.subr.mxu0 0.0
    %750 = vmatpush1.msra.mxu0 0.0
    %751 = vmatprep.subr.mxu0 0.0
    %752 = vmatpush1.msra.mxu0 0.0
    %753 = vmatprep.subr.mxu0 0.0
    %754 = vmatpush1.msra.mxu0 0.0
    %755 = vmatprep.subr.mxu0 0.0
    %756 = vmatpush1.msra.mxu0 0.0
    %757 = vmatprep.subr.mxu0 0.0
    %758 = vmatpush1.msra.mxu0 0.0
    %759 = vmatprep.subr.mxu0 0.0
    %760 = vmatpush1.msra.mxu0 0.0
    %761 = vmatprep.subr.mxu0 0.0
    %762 = vmatpush1.msra.mxu0 0.0
    %763 = vmatprep.subr.mxu0 0.0
    %764 = vmatpush1.msra.mxu0 0.0
    %765 = vmatprep.subr.mxu0 0.0
    %766 = vmatpush1.msra.mxu0 %v187
    %767 = vmatprep.subr.mxu0 0.0
    %768 = vmatpush1.msra.mxu0 %v186
    %769 = vmatprep.subr.mxu0 0.0
    %770 = vmatpush1.msra.mxu0 %v185
    %771 = vmatprep.subr.mxu0 0.0
    %772 = vmatpush1.msra.mxu0 %v184
    %773 = vmatprep.subr.mxu0 0.0
    %774 = vmatpush2.msra.mxu0 0.0
    %775 = vmatprep.subr.mxu0 0.0
    %776 = vmatpush2.msra.mxu0 0.0
    %777 = vmatprep.subr.mxu0 0.0
    %778 = vmatpush2.msra.mxu0 0.0
    %779 = vmatprep.subr.mxu0 0.0
    %780 = vmatpush2.msra.mxu0 0.0
    %781 = vmatprep.subr.mxu0 0.0
    %782 = vmatpush2.msra.mxu0 0.0
    %783 = vmatprep.subr.mxu0 0.0
    %784 = vmatpush2.msra.mxu0 0.0
    %785 = vmatprep.subr.mxu0 0.0
    %786 = vmatpush2.msra.mxu0 0.0
    %787 = vmatprep.subr.mxu0 0.0
    %788 = vmatpush2.msra.mxu0 0.0
    %789 = vmatprep.subr.mxu0 0.0
    %790 = vmatpush2.msra.mxu0 0.0
    %791 = vmatprep.subr.mxu0 0.0
    %792 = vmatpush2.msra.mxu0 0.0
    %793 = vmatprep.subr.mxu0 0.0
    %794 = vmatpush2.msra.mxu0 0.0
    %795 = vmatprep.subr.mxu0 0.0
    %796 = vmatpush2.msra.mxu0 0.0
    %797 = vmatprep.subr.mxu0 0.0
    %798 = vmatpush2.msra.mxu0 0.0
    %799 = vmatprep.subr.mxu0 0.0
    %800 = vmatpush2.msra.mxu0 0.0
    %801 = vmatprep.subr.mxu0 0.0
    %802 = vmatpush2.msra.mxu0 0.0
    %803 = vmatprep.subr.mxu0 0.0
    %804 = vmatpush2.msra.mxu0 0.0
    %805 = vmatprep.mubr.f32.mxu0 0.0
    %806 = vmatmul.mubr.f32.gmra.mxu0 %v739
    %v807 = vpop.f32.mrf.mxu0
    %v808 = vadd.f32 0.0, %v807
    %v809 = vpop.f32.mrf.mxu0
    %810 = vdwg.mxu0
    %v812 = vrot.slane %v808, 6
    %v814 = vadd.f32 %v181, %v812
    %v815 = vxor.u32 %v814, 2147483648
    %v816 = vmul.f32 %v815, 1.442695
    %v817 = vpow.pop %v816
    %v818 = vadd.f32 %v817, 1.0
    %v819 = vrcp.pop %v818
    %v820 = vmul.f32 1.0, %v819
    %v821 = vtanh.pop %v814
    %v823 = vrot.slane %v727, 6
    %v825 = vmul.f32 %v820, %v823
    %827 = vrot.lane.b32.xlu0 %v821, 64
    %v828 = vpop.permute.xlu0 %827
    %v830 = vmul.f32 %v820, %v828
    %832 = vrot.lane.b32.xlu0 %v830, 32
    %v833 = vpop.permute.xlu0 %832
    %v835 = vadd.f32 %v825, %v833
    %v836 = vtanh.pop %v835
    %838 = vrot.lane.b32.xlu0 %v836, 64
    %v839 = vpop.permute.xlu0 %838
    %v841 = vmul.f32 %v820, %v839
    %843 = vrot.lane.b32.xlu0 %v841, 32
    %v844 = vpop.permute.xlu0 %843
    %846 = vst.msk [vmem:[#allocation2 + $0x8] sm:$0xc] %vm405, %v844
    %v847 = vrot.slane %v841, 2
    %848 = vrot.lane.b32.xlu0 %v847, 32
    %v849 = vpop.permute.xlu0 %848
    %v850 = vsel %vm102, %v849, 0
    %852 = vmatprep.subr.mxu0 0.0
    %853 = vmatpush1.msra.mxu0 0.0
    %854 = vmatprep.subr.mxu0 0.0
    %855 = vmatpush1.msra.mxu0 0.0
    %856 = vmatprep.subr.mxu0 0.0
    %857 = vmatpush1.msra.mxu0 0.0
    %858 = vmatprep.subr.mxu0 0.0
    %859 = vmatpush1.msra.mxu0 0.0
    %860 = vmatprep.subr.mxu0 0.0
    %861 = vmatpush1.msra.mxu0 0.0
    %862 = vmatprep.subr.mxu0 0.0
    %863 = vmatpush1.msra.mxu0 0.0
    %864 = vmatprep.subr.mxu0 0.0
    %865 = vmatpush1.msra.mxu0 0.0
    %866 = vmatprep.subr.mxu0 0.0
    %867 = vmatpush1.msra.mxu0 0.0
    %868 = vmatprep.subr.mxu0 0.0
    %869 = vmatpush1.msra.mxu0 0.0
    %870 = vmatprep.subr.mxu0 0.0
    %871 = vmatpush1.msra.mxu0 0.0
    %872 = vmatprep.subr.mxu0 0.0
    %873 = vmatpush1.msra.mxu0 0.0
    %874 = vmatprep.subr.mxu0 0.0
    %875 = vmatpush1.msra.mxu0 0.0
    %876 = vmatprep.subr.mxu0 0.0
    %877 = vmatpush1.msra.mxu0 %v187
    %878 = vmatprep.subr.mxu0 0.0
    %879 = vmatpush1.msra.mxu0 %v186
    %880 = vmatprep.subr.mxu0 0.0
    %881 = vmatpush1.msra.mxu0 %v185
    %882 = vmatprep.subr.mxu0 0.0
    %883 = vmatpush1.msra.mxu0 %v184
    %884 = vmatprep.subr.mxu0 0.0
    %885 = vmatpush2.msra.mxu0 0.0
    %886 = vmatprep.subr.mxu0 0.0
    %887 = vmatpush2.msra.mxu0 0.0
    %888 = vmatprep.subr.mxu0 0.0
    %889 = vmatpush2.msra.mxu0 0.0
    %890 = vmatprep.subr.mxu0 0.0
    %891 = vmatpush2.msra.mxu0 0.0
    %892 = vmatprep.subr.mxu0 0.0
    %893 = vmatpush2.msra.mxu0 0.0
    %894 = vmatprep.subr.mxu0 0.0
    %895 = vmatpush2.msra.mxu0 0.0
    %896 = vmatprep.subr.mxu0 0.0
    %897 = vmatpush2.msra.mxu0 0.0
    %898 = vmatprep.subr.mxu0 0.0
    %899 = vmatpush2.msra.mxu0 0.0
    %900 = vmatprep.subr.mxu0 0.0
    %901 = vmatpush2.msra.mxu0 0.0
    %902 = vmatprep.subr.mxu0 0.0
    %903 = vmatpush2.msra.mxu0 0.0
    %904 = vmatprep.subr.mxu0 0.0
    %905 = vmatpush2.msra.mxu0 0.0
    %906 = vmatprep.subr.mxu0 0.0
    %907 = vmatpush2.msra.mxu0 0.0
    %908 = vmatprep.subr.mxu0 0.0
    %909 = vmatpush2.msra.mxu0 0.0
    %910 = vmatprep.subr.mxu0 0.0
    %911 = vmatpush2.msra.mxu0 0.0
    %912 = vmatprep.subr.mxu0 0.0
    %913 = vmatpush2.msra.mxu0 0.0
    %914 = vmatprep.subr.mxu0 0.0
    %915 = vmatpush2.msra.mxu0 0.0
    %916 = vmatprep.mubr.f32.mxu0 0.0
    %917 = vmatmul.mubr.f32.gmra.mxu0 %v850
    %v918 = vpop.f32.mrf.mxu0
    %v919 = vadd.f32 0.0, %v918
    %v920 = vpop.f32.mrf.mxu0
    %921 = vdwg.mxu0
    %v923 = vrot.slane %v919, 4
    %v925 = vadd.f32 %v181, %v923
    %v926 = vxor.u32 %v925, 2147483648
    %v927 = vmul.f32 %v926, 1.442695
    %v928 = vpow.pop %v927
    %v929 = vadd.f32 %v928, 1.0
    %v930 = vrcp.pop %v929
    %v931 = vmul.f32 1.0, %v930
    %v932 = vtanh.pop %v925
    %v934 = vrot.slane %v835, 6
    %v936 = vmul.f32 %v931, %v934
    %938 = vrot.lane.b32.xlu0 %v932, 64
    %v939 = vpop.permute.xlu0 %938
    %v941 = vmul.f32 %v931, %v939
    %943 = vrot.lane.b32.xlu0 %v941, 32
    %v944 = vpop.permute.xlu0 %943
    %v946 = vadd.f32 %v936, %v944
    %v947 = vtanh.pop %v946
    %949 = vrot.lane.b32.xlu0 %v947, 64
    %v950 = vpop.permute.xlu0 %949
    %v952 = vmul.f32 %v931, %v950
    %954 = vrot.lane.b32.xlu0 %v952, 32
    %v955 = vpop.permute.xlu0 %954
    %957 = vst.msk [vmem:[#allocation2 + $0x8] sm:$0x30] %vm517, %v955
    %v958 = vrot.slane %v952, 4
    %959 = vrot.lane.b32.xlu0 %v958, 32
    %v960 = vpop.permute.xlu0 %959
    %v961 = vsel %vm102, %v960, 0
    %963 = vmatprep.subr.mxu0 0.0
    %964 = vmatpush1.msra.mxu0 0.0
    %965 = vmatprep.subr.mxu0 0.0
    %966 = vmatpush1.msra.mxu0 0.0
    %967 = vmatprep.subr.mxu0 0.0
    %968 = vmatpush1.msra.mxu0 0.0
    %969 = vmatprep.subr.mxu0 0.0
    %970 = vmatpush1.msra.mxu0 0.0
    %971 = vmatprep.subr.mxu0 0.0
    %972 = vmatpush1.msra.mxu0 0.0
    %973 = vmatprep.subr.mxu0 0.0
    %974 = vmatpush1.msra.mxu0 0.0
    %975 = vmatprep.subr.mxu0 0.0
    %976 = vmatpush1.msra.mxu0 0.0
    %977 = vmatprep.subr.mxu0 0.0
    %978 = vmatpush1.msra.mxu0 0.0
    %979 = vmatprep.subr.mxu0 0.0
    %980 = vmatpush1.msra.mxu0 0.0
    %981 = vmatprep.subr.mxu0 0.0
    %982 = vmatpush1.msra.mxu0 0.0
    %983 = vmatprep.subr.mxu0 0.0
    %984 = vmatpush1.msra.mxu0 0.0
    %985 = vmatprep.subr.mxu0 0.0
    %986 = vmatpush1.msra.mxu0 0.0
    %987 = vmatprep.subr.mxu0 0.0
    %988 = vmatpush1.msra.mxu0 %v187
    %989 = vmatprep.subr.mxu0 0.0
    %990 = vmatpush1.msra.mxu0 %v186
    %991 = vmatprep.subr.mxu0 0.0
    %992 = vmatpush1.msra.mxu0 %v185
    %993 = vmatprep.subr.mxu0 0.0
    %994 = vmatpush1.msra.mxu0 %v184
    %995 = vmatprep.subr.mxu0 0.0
    %996 = vmatpush2.msra.mxu0 0.0
    %997 = vmatprep.subr.mxu0 0.0
    %998 = vmatpush2.msra.mxu0 0.0
    %999 = vmatprep.subr.mxu0 0.0
    %1000 = vmatpush2.msra.mxu0 0.0
    %1001 = vmatprep.subr.mxu0 0.0
    %1002 = vmatpush2.msra.mxu0 0.0
    %1003 = vmatprep.subr.mxu0 0.0
    %1004 = vmatpush2.msra.mxu0 0.0
    %1005 = vmatprep.subr.mxu0 0.0
    %1006 = vmatpush2.msra.mxu0 0.0
    %1007 = vmatprep.subr.mxu0 0.0
    %1008 = vmatpush2.msra.mxu0 0.0
    %1009 = vmatprep.subr.mxu0 0.0
    %1010 = vmatpush2.msra.mxu0 0.0
    %1011 = vmatprep.subr.mxu0 0.0
    %1012 = vmatpush2.msra.mxu0 0.0
    %1013 = vmatprep.subr.mxu0 0.0
    %1014 = vmatpush2.msra.mxu0 0.0
    %1015 = vmatprep.subr.mxu0 0.0
    %1016 = vmatpush2.msra.mxu0 0.0
    %1017 = vmatprep.subr.mxu0 0.0
    %1018 = vmatpush2.msra.mxu0 0.0
    %1019 = vmatprep.subr.mxu0 0.0
    %1020 = vmatpush2.msra.mxu0 0.0
    %1021 = vmatprep.subr.mxu0 0.0
    %1022 = vmatpush2.msra.mxu0 0.0
    %1023 = vmatprep.subr.mxu0 0.0
    %1024 = vmatpush2.msra.mxu0 0.0
    %1025 = vmatprep.subr.mxu0 0.0
    %1026 = vmatpush2.msra.mxu0 0.0
    %1027 = vmatprep.mubr.f32.mxu0 0.0
    %1028 = vmatmul.mubr.f32.gmra.mxu0 %v961
    %v1029 = vpop.f32.mrf.mxu0
    %v1030 = vadd.f32 0.0, %v1029
    %v1031 = vpop.f32.mrf.mxu0
    %1032 = vdwg.mxu0
    %v1034 = vrot.slane %v1030, 2
    %v1036 = vadd.f32 %v181, %v1034
    %v1037 = vxor.u32 %v1036, 2147483648
    %v1038 = vmul.f32 %v1037, 1.442695
    %v1039 = vpow.pop %v1038
    %v1040 = vadd.f32 %v1039, 1.0
    %v1041 = vrcp.pop %v1040
    %v1042 = vmul.f32 1.0, %v1041
    %v1043 = vtanh.pop %v1036
    %v1045 = vrot.slane %v946, 6
    %v1047 = vmul.f32 %v1042, %v1045
    %1049 = vrot.lane.b32.xlu0 %v1043, 64
    %v1050 = vpop.permute.xlu0 %1049
    %v1052 = vmul.f32 %v1042, %v1050
    %1054 = vrot.lane.b32.xlu0 %v1052, 32
    %v1055 = vpop.permute.xlu0 %1054
    %v1057 = vadd.f32 %v1047, %v1055
    %v1058 = vtanh.pop %v1057
    %1060 = vrot.lane.b32.xlu0 %v1058, 64
    %v1061 = vpop.permute.xlu0 %1060
    %v1063 = vmul.f32 %v1042, %v1061
    %1065 = vrot.lane.b32.xlu0 %v1063, 32
    %v1066 = vpop.permute.xlu0 %1065
    %1068 = vst.msk [vmem:[#allocation2 + $0x8] sm:$0xc0] %vm629, %v1066
    %v1069 = vld [vmem:[#allocation2] sm:$0xff]
    %v1070 = vld [vmem:[#allocation2 + $0x8] sm:$0xff]
    %v1071 = vld [vmem:[#allocation8] sm:$0xff]
    %v1072 = vld [vmem:[#allocation8 + $0x8] sm:$0xff]
    %v1073 = vld [vmem:[#allocation8 + $0x10] sm:$0xff]
    %v1074 = vld [vmem:[#allocation8 + $0x18] sm:$0xff]
    %v1075 = vld [vmem:[%s7] sm:$0x1]
    %v1077 = vlaneseq
    %v1078 = vshrl.u32 %v1077, 7
    %v1079 = vsub.s32 0, %v1078
    %v1080 = vrot.slane %v1075, %v1079
    %v1083 = vsel %vm102, %v1069, 0
    %v1086 = vsel %vm102, %v1070, 0
    %1088 = vmatprep.subr.mxu0 0.0
    %1089 = vmatpush1.msra.mxu0 0.0
    %1090 = vmatprep.subr.mxu0 0.0
    %1091 = vmatpush1.msra.mxu0 0.0
    %1092 = vmatprep.subr.mxu0 0.0
    %1093 = vmatpush1.msra.mxu0 0.0
    %1094 = vmatprep.subr.mxu0 0.0
    %1095 = vmatpush1.msra.mxu0 0.0
    %1096 = vmatprep.subr.mxu0 0.0
    %1097 = vmatpush1.msra.mxu0 0.0
    %1098 = vmatprep.subr.mxu0 0.0
    %1099 = vmatpush1.msra.mxu0 0.0
    %1100 = vmatprep.subr.mxu0 0.0
    %1101 = vmatpush1.msra.mxu0 0.0
    %1102 = vmatprep.subr.mxu0 0.0
    %1103 = vmatpush1.msra.mxu0 0.0
    %1104 = vmatprep.subr.mxu0 0.0
    %1105 = vmatpush1.msra.mxu0 0.0
    %1106 = vmatprep.subr.mxu0 0.0
    %1107 = vmatpush1.msra.mxu0 0.0
    %1108 = vmatprep.subr.mxu0 0.0
    %1109 = vmatpush1.msra.mxu0 0.0
    %1110 = vmatprep.subr.mxu0 0.0
    %1111 = vmatpush1.msra.mxu0 0.0
    %1112 = vmatprep.subr.mxu0 0.0
    %1113 = vmatpush1.msra.mxu0 %v1074
    %1114 = vmatprep.subr.mxu0 0.0
    %1115 = vmatpush1.msra.mxu0 %v1073
    %1116 = vmatprep.subr.mxu0 0.0
    %1117 = vmatpush1.msra.mxu0 %v1072
    %1118 = vmatprep.subr.mxu0 0.0
    %1119 = vmatpush1.msra.mxu0 %v1071
    %1120 = vmatprep.subr.mxu0 0.0
    %1121 = vmatpush2.msra.mxu0 0.0
    %1122 = vmatprep.subr.mxu0 0.0
    %1123 = vmatpush2.msra.mxu0 0.0
    %1124 = vmatprep.subr.mxu0 0.0
    %1125 = vmatpush2.msra.mxu0 0.0
    %1126 = vmatprep.subr.mxu0 0.0
    %1127 = vmatpush2.msra.mxu0 0.0
    %1128 = vmatprep.subr.mxu0 0.0
    %1129 = vmatpush2.msra.mxu0 0.0
    %1130 = vmatprep.subr.mxu0 0.0
    %1131 = vmatpush2.msra.mxu0 0.0
    %1132 = vmatprep.subr.mxu0 0.0
    %1133 = vmatpush2.msra.mxu0 0.0
    %1134 = vmatprep.subr.mxu0 0.0
    %1135 = vmatpush2.msra.mxu0 0.0
    %1136 = vmatprep.subr.mxu0 0.0
    %1137 = vmatpush2.msra.mxu0 0.0
    %1138 = vmatprep.subr.mxu0 0.0
    %1139 = vmatpush2.msra.mxu0 0.0
    %1140 = vmatprep.subr.mxu0 0.0
    %1141 = vmatpush2.msra.mxu0 0.0
    %1142 = vmatprep.subr.mxu0 0.0
    %1143 = vmatpush2.msra.mxu0 0.0
    %1144 = vmatprep.subr.mxu0 0.0
    %1145 = vmatpush2.msra.mxu0 0.0
    %1146 = vmatprep.subr.mxu0 0.0
    %1147 = vmatpush2.msra.mxu0 0.0
    %1148 = vmatprep.subr.mxu0 0.0
    %1149 = vmatpush2.msra.mxu0 0.0
    %1150 = vmatprep.subr.mxu0 0.0
    %1151 = vmatpush2.msra.mxu0 0.0
    %1152 = vmatprep.mubr.f32.mxu0 0.0
    %1153 = vmatmul.mubr.f32.gmra.mxu0 %v1083
    %v1154 = vpop.f32.mrf.mxu0
    %v1155 = vadd.f32 %v1080, %v1154
    %v1156 = vpop.f32.mrf.mxu0
    %1157 = vmatprep.mubr.f32.mxu0 0.0
    %1158 = vmatmul.mubr.f32.gmra.mxu0 %v1086
    %v1159 = vpop.f32.mrf.mxu0
    %v1160 = vadd.f32 %v1080, %v1159
    %v1161 = vpop.f32.mrf.mxu0
    %1162 = vdwg.mxu0
    %1163 = vst.msk [vmem:[#allocation9] sm:$0xff] %vm102, %v1155
    %1164 = vst.msk [vmem:[#allocation9 + $0x8] sm:$0xff] %vm102, %v1160
    %1165 = vst.msk [vmem:[#allocation10 - $0x6] sm:$0xc0] %vm629, %v1066
    %1167 = vrot.lane.b32.xlu0 %v1057, 96
    %v1168 = vpop.permute.xlu0 %1167
    %1170 = vst.msk [vmem:[#allocation12 - $0x6] sm:$0xc0] %vm629, %v1168
    // Predicated region
    $region46: #{tpu_custom_call.1} parent=1 // pred_check
      _
    $region47: #{tpu_custom_call.1} parent=1 // pred_check_branch
      %1172 = sbr.rel (0) target = $region49
    $region48: #{tpu_custom_call.1} parent=1 // pred_region
      %s1174 = ssub.s32 256, 256
      %1175 = vsyncadd [#allocation5], %s1174
      %s1176 = sshll.u32 [#allocation9], 4
      %s1177 = int_to_ptr.vmem [resolvable:$true] %s1176
      %1182 = dma.vmem_to_hbm [thread:$0]  %s1177, 256, %s8, [#allocation5], 128, 128, 8
    $region49: #{tpu_custom_call.1} parent=1 // pred_fallthru
      _
    // Predicated region
    $region50: #{tpu_custom_call.1} parent=1 // pred_check
      _
    $region51: #{tpu_custom_call.1} parent=1 // pred_check_branch
      %1184 = sbr.rel (0) target = $region53
    $region52: #{tpu_custom_call.1} parent=1 // pred_region
      %s1186 = ssub.s32 32, 32
      %1187 = vsyncadd [#allocation11], %s1186
      %s1189 = sshll.u32 [#allocation10], 4
      %s1190 = int_to_ptr.vmem [resolvable:$true] %s1189
      %1192 = dma.vmem_to_hbm [thread:$0]  %s1190, 32, %s9, [#allocation11]
    $region53: #{tpu_custom_call.1} parent=1 // pred_fallthru
      _
    // Predicated region
    $region54: #{tpu_custom_call.1} parent=1 // pred_check
      _
    $region55: #{tpu_custom_call.1} parent=1 // pred_check_branch
      %1194 = sbr.rel (0) target = $region57
    $region56: #{tpu_custom_call.1} parent=1 // pred_region
      %s1196 = ssub.s32 32, 32
      %1197 = vsyncadd [#allocation11], %s1196
      %s1199 = sshll.u32 [#allocation12], 4
      %s1200 = int_to_ptr.vmem [resolvable:$true] %s1199
      %1202 = dma.vmem_to_hbm [thread:$0]  %s1200, 32, %s10, [#allocation11]
    $region57: #{tpu_custom_call.1} parent=1 // pred_fallthru
      _
    // Predicated region
    $region58: #{tpu_custom_call.1} parent=1 // pred_check
      _
    $region59: #{tpu_custom_call.1} parent=1 // pred_check_branch
      %1204 = sbr.rel (0) target = $region61
    $region60: #{tpu_custom_call.1} parent=1 // pred_region
      %1205 = dma.done [#allocation5], 256
    $region61: #{tpu_custom_call.1} parent=1 // pred_fallthru
      _
    // Predicated region
    $region62: #{tpu_custom_call.1} parent=1 // pred_check
      _
    $region63: #{tpu_custom_call.1} parent=1 // pred_check_branch
      %1207 = sbr.rel (0) target = $region65
    $region64: #{tpu_custom_call.1} parent=1 // pred_region
      %1208 = dma.done [#allocation11], 32
    $region65: #{tpu_custom_call.1} parent=1 // pred_fallthru
      _
    // Predicated region
    $region66: #{tpu_custom_call.1} parent=1 // pred_check
      _
    $region67: #{tpu_custom_call.1} parent=1 // pred_check_branch
      %1210 = sbr.rel (0) target = $region69
    $region68: #{tpu_custom_call.1} parent=1 // pred_region
      %1211 = dma.done [#allocation11], 32
    $region69: #{tpu_custom_call.1} parent=1 // pred_fallthru
      _
    %1212 = vsyncpa [#allocation4], 1
    %1213 = vsyncpa [#allocation7], 1
    %1214 = vsyncpa [#allocation5], 1
    %1215 = vsyncpa [#allocation11], 1

</llo_original>
